<compile_context>
chip_gen: v7x
topology: tpu7x:2x2x1
jax: 0.10.0
libtpu: 0.0.40
codegen_flags: <defaults>
</compile_context>

<pallas_src>
import functools

import jax
import jax.numpy as jnp
from jax import lax
from jax.experimental import pallas as pl
from jax.experimental.pallas import tpu as pltpu


def _pick_tile(n, prefer):
    """Largest multiple-of-128 tile <= prefer that divides n (requires n % 128 == 0)."""
    t = min(prefer, n)
    t = max(128, (t // 128) * 128)
    while t > 128 and n % t != 0:
        t -= 128
    return t


# ---------------------------------------------------------------------------
# Prologue kernel: single streaming pass over A^T (column axis = reduction, last):
#   deg[v] = sum_u AT[v, u]      -> dinv = rsqrt(max(deg, 1))
#   at16   = bf16(AT)            (0/1 entries -> exact, feeds the MXU)
#   xs0    = bf16(dinv * feat)   (pre-scaled / pre-cast RHS of the first order)
# ---------------------------------------------------------------------------
def prologue_kernel(at_ref, feat_ref, at16_ref, dinv_ref, xs_ref, acc_ref):
    j = pl.program_id(1)

    @pl.when(j == 0)
    def _init():
        acc_ref[...] = jnp.zeros_like(acc_ref)

    a = at_ref[...]
    at16_ref[...] = a.astype(jnp.bfloat16)
    acc_ref[...] += jnp.sum(a, axis=1, keepdims=True)

    @pl.when(j == pl.num_programs(1) - 1)
    def _finalize():
        dinv = lax.rsqrt(jnp.maximum(acc_ref[...], 1.0))
        dinv_ref[...] = dinv
        xs_ref[...] = (dinv * feat_ref[...]).astype(jnp.bfloat16)


def _prologue(at, feat, *, tile=512):
    n = at.shape[0]
    f = feat.shape[1]
    tp = _pick_tile(n, tile)
    return pl.pallas_call(
        prologue_kernel,
        out_shape=(jax.ShapeDtypeStruct((n, n), jnp.bfloat16),   # at16
                   jax.ShapeDtypeStruct((n, 1), jnp.float32),    # dinv
                   jax.ShapeDtypeStruct((n, f), jnp.bfloat16)),  # xs0 = bf16(dinv*feat)
        grid=(n // tp, n // tp),
        in_specs=[
            pl.BlockSpec((tp, tp), lambda i, j: (i, j)),     # A^T tile (f32 input)
            pl.BlockSpec((tp, f), lambda i, j: (i, 0)),      # feat row tile (once per i)
        ],
        out_specs=(
            pl.BlockSpec((tp, tp), lambda i, j: (i, j)),
            pl.BlockSpec((tp, 1), lambda i, j: (i, 0)),
            pl.BlockSpec((tp, f), lambda i, j: (i, 0)),
        ),
        scratch_shapes=[pltpu.VMEM((tp, 1), jnp.float32)],
        compiler_params=pltpu.CompilerParams(
            dimension_semantics=("parallel", "arbitrary"),
            vmem_limit_bytes=32 * 1024 * 1024),
    )(at, feat)


# ---------------------------------------------------------------------------
# Fully fused path: A^T (bf16), feat, h and temporaries all resident in VMEM,
# all K-1 propagation orders inside one kernel (no grid).
# ---------------------------------------------------------------------------
def make_fused_kernel(theta):
    theta = [float(t) for t in theta]

    def kernel(at16_ref, feat_ref, xs_ref, dinv_ref, h_ref):
        dinv = dinv_ref[...]
        x = feat_ref[...]
        xs = xs_ref[...]                      # bf16(dinv * x), from the prologue
        h = theta[0] * x
        for k in range(1, len(theta)):
            x = x - dinv * jnp.dot(at16_ref[...], xs,
                                   preferred_element_type=jnp.float32)
            h = h + theta[k] * x
            if k + 1 < len(theta):
                xs = (dinv * x).astype(jnp.bfloat16)
        h_ref[...] = h

    return kernel


# ---------------------------------------------------------------------------
# Tiled per-order path (large graphs). One pallas_call per order k >= 1:
#   acc     += AT_tile(bf16) @ xs_tile(bf16)        (f32 VMEM accumulator)
#   feat_new = feat - dinv * acc                    (finalize, last reduction tile)
#   xs_new   = bf16(dinv * feat_new)                (next step's RHS, cast once)
#   h_new    = c_prev * h_in + theta_k * feat_new
# Reduction (column) axis is LAST + "arbitrary"; row axis "parallel" (megacore).
# ---------------------------------------------------------------------------
def make_poly_step_kernel(c_prev, theta_k, tn, rhs_resident):
    c_prev = float(c_prev)
    theta_k = float(theta_k)

    def kernel(at16_ref, xs_ref, feat_ref, h_ref, dinv_ref,
               feat_out_ref, xs_out_ref, h_out_ref, acc_ref):
        j = pl.program_id(1)

        @pl.when(j == 0)
        def _init():
            acc_ref[...] = jnp.zeros_like(acc_ref)

        if rhs_resident:
            # Whole bf16 RHS lives in VMEM; slice the reduction window out of it.
            rhs = xs_ref[pl.ds(pl.multiple_of(j * tn, tn), tn), :]
        else:
            rhs = xs_ref[...]
        acc_ref[...] += jnp.dot(at16_ref[...], rhs,
                                preferred_element_type=jnp.float32)

        @pl.when(j == pl.num_programs(1) - 1)
        def _finalize():
            dinv = dinv_ref[...]
            feat_new = feat_ref[...] - dinv * acc_ref[...]
            feat_out_ref[...] = feat_new
            xs_out_ref[...] = (dinv * feat_new).astype(jnp.bfloat16)
            h_out_ref[...] = c_prev * h_ref[...] + theta_k * feat_new

    return kernel


def _poly_step(kernel, at16, xs, feat, h, dinv, *, tm, tn, rhs_resident):
    n, f = feat.shape
    grid = (n // tm, n // tn)                 # (row tiles, reduction tiles)
    if rhs_resident:
        xs_spec = pl.BlockSpec((n, f), lambda i, j: (0, 0))     # resident, 1 DMA per call
        xs_bytes = n * f * 2
    else:
        xs_spec = pl.BlockSpec((tn, f), lambda i, j: (j, 0))    # streamed bf16 fallback
        xs_bytes = (n // tm) * n * f * 2
    return pl.pallas_call(
        kernel,
        out_shape=(jax.ShapeDtypeStruct((n, f), jnp.float32),    # feat_new (exact f32)
                   jax.ShapeDtypeStruct((n, f), jnp.bfloat16),   # bf16(dinv*feat_new)
                   jax.ShapeDtypeStruct((n, f), jnp.float32)),   # h_new
        grid=grid,
        in_specs=[
            pl.BlockSpec((tm, tn), lambda i, j: (i, j)),         # A^T tile (bf16)
            xs_spec,                                             # matmul RHS (bf16)
            pl.BlockSpec((tm, f), lambda i, j: (i, 0)),          # feat rows (f32)
            pl.BlockSpec((tm, f), lambda i, j: (i, 0)),          # h_in
            pl.BlockSpec((tm, 1), lambda i, j: (i, 0)),          # dinv rows
        ],
        out_specs=(
            pl.BlockSpec((tm, f), lambda i, j: (i, 0)),
            pl.BlockSpec((tm, f), lambda i, j: (i, 0)),
            pl.BlockSpec((tm, f), lambda i, j: (i, 0)),
        ),
        scratch_shapes=[pltpu.VMEM((tm, f), jnp.float32)],
        compiler_params=pltpu.CompilerParams(
            dimension_semantics=("parallel", "arbitrary"),
            vmem_limit_bytes=32 * 1024 * 1024),
        cost_estimate=pl.CostEstimate(
            flops=2 * n * n * f + 6 * n * f,
            transcendentals=0,
            bytes_accessed=n * n * 2 + xs_bytes + n * f * (4 + 4 + 4 + 4 + 2) + n * 4),
    )(at16, xs, feat, h, dinv)


def poly_conv_forward(at, feat, theta, *, tm=256, tn=256, prologue_tile=512,
                      force_tiled=False, rhs_resident=None):
    """PolyConv forward on a dense graph.

    at:    (N, N) f32, at[v, u] = 1.0 iff edge u -> v (transposed adjacency).
    feat:  (N, F) f32 node features.
    theta: list of K python floats (module constructor constants).
    """
    n = at.shape[0]
    f = feat.shape[1]
    assert at.shape == (n, n) and feat.shape == (n, f)
    assert n % 128 == 0, "N must be a multiple of 128"
    assert f % 128 == 0, "feature dim must be lane-dense (multiple of 128)"

    k_orders = len(theta)
    if k_orders == 1:
        # Degenerate K=1 case: no propagation, pure scaling (left to plain XLA).
        return theta[0] * feat

    at16, dinv, xs0 = _prologue(at, feat, tile=prologue_tile)

    # --- fully fused path (small/medium graphs): everything resident in VMEM ----
    fused_bytes = n * n * 2 + 8 * n * f * 4
    if (not force_tiled) and fused_bytes <= 12 * 1024 * 1024:
        return pl.pallas_call(
            make_fused_kernel(theta),
            out_shape=jax.ShapeDtypeStruct((n, f), jnp.float32),
            compiler_params=pltpu.CompilerParams(
                vmem_limit_bytes=32 * 1024 * 1024),
        )(at16, feat, xs0, dinv)

    # --- tiled per-order path ---------------------------------------------------
    # Keep >= 2 row tiles so the "parallel" axis still shards across v7x's 2 TCs.
    tm_eff = _pick_tile(n, min(tm, max(128, n // 2)))
    tn_eff = _pick_tile(n, tn)
    if rhs_resident is None:
        rhs_resident = (2 * n * f * 2) <= 12 * 1024 * 1024   # double-buffered bf16 RHS

    feat_cur, xs_cur, h = feat, xs0, feat
    for k in range(1, k_orders):
        c_prev = theta[0] if k == 1 else 1.0   # first step folds h0 = theta[0]*feat
        kernel = make_poly_step_kernel(c_prev, theta[k], tn_eff, rhs_resident)
        feat_cur, xs_cur, h = _poly_step(kernel, at16, xs_cur, feat_cur, h, dinv,
                                         tm=tm_eff, tn=tn_eff,
                                         rhs_resident=rhs_resident)
    return h


# ---------------------------------------------------------------------------
# Pure-JAX references.
# ---------------------------------------------------------------------------
def reference(at, feat, theta, *, use_bf16):
    deg = at.sum(axis=1, keepdims=True)
    dinv = lax.rsqrt(jnp.maximum(deg, 1.0))
    if use_bf16:   # mirrors the kernel: exact 0/1 bf16 A^T, bf16 (dinv*x) RHS, f32 acc
        at16 = at.astype(jnp.bfloat16)

        def prop(x):
            xs = (dinv * x).astype(jnp.bfloat16)
            return dinv * jnp.dot(at16, xs, preferred_element_type=jnp.float32)
    else:          # exact f32 math
        def prop(x):
            return dinv * (at @ (dinv * x))
    h = theta[0] * feat
    x = feat
    for k in range(1, len(theta)):
        x = x - prop(x)
        h = h + theta[k] * x
    return h


if __name__ == "__main__":
    THETA = [0.6, 0.3, 0.1]         # K = 3 polynomial coefficients
    key = jax.random.PRNGKey(0)

    def run_case(n, f, p_edge, **fwd_kwargs):
        k_a, k_x = jax.random.split(jax.random.fold_in(key, n))
        # deterministic random directed graph (dense), no self loops
        a = (jax.random.uniform(k_a, (n, n)) < p_edge).astype(jnp.float32)
        a = a * (1.0 - jnp.eye(n, dtype=jnp.float32))   # A[u, v] = 1 iff edge u -> v
        at = a.T                                        # AT[v, u] = 1 iff edge u -> v
        feat = jax.random.normal(k_x, (n, f), dtype=jnp.float32)

        fwd = jax.jit(functools.partial(poly_conv_forward, theta=THETA, **fwd_kwargs))
        out = jax.block_until_ready(fwd(at, feat))
        assert out.shape == (n, f)

        # Tight check vs a reference mirroring the kernel's bf16 propagation math.
        ref_b = reference(at, feat, THETA, use_bf16=True)
        assert jnp.allclose(out, ref_b, atol=5e-3, rtol=5e-3), \
            float(jnp.max(jnp.abs(out - ref_b)))
        # Loose check vs exact f32 math (only bf16 RHS rounding differs).
        ref_f = reference(at, feat, THETA, use_bf16=False)
        assert jnp.allclose(out, ref_f, atol=2e-2, rtol=2e-2), \
            float(jnp.max(jnp.abs(out - ref_f)))

    # 1) Small graph -> fully fused single-kernel path (A^T resident in VMEM).
    run_case(256, 128, 0.05)
    # 2) Tiled multi-order path, 256x256 tiles, resident bf16 RHS (grid 2x2 per step).
    run_case(512, 128, 0.03, force_tiled=True)
    # 3) Tiled path with the streamed bf16 RHS fallback (exercises the large-N branch).
    run_case(512, 128, 0.03, force_tiled=True, rhs_resident=False)

    print("KERNEL_OK")
</pallas_src>

<mosaic_0001>
module attributes {stable_mosaic.version = 11 : i64} {
  func.func @kernel(%arg0: memref<256x256xbf16, #tpu.memory_space<vmem>>, %arg1: memref<256x128xf32, #tpu.memory_space<vmem>>, %arg2: memref<256x128xbf16, #tpu.memory_space<vmem>>, %arg3: memref<256x1xf32, #tpu.memory_space<vmem>>, %arg4: memref<256x128xf32, #tpu.memory_space<vmem>>) attributes {dimension_semantics = [], scalar_prefetch = 0 : i64, scratch_operands = 0 : i64, tpu.core_type = #tpu.core_type<tc>} {
    %c0 = arith.constant 0 : index
    %c0_0 = arith.constant 0 : index
    %0 = vector.load %arg3[%c0, %c0_0] : memref<256x1xf32, #tpu.memory_space<vmem>>, vector<256x1xf32>
    %c0_1 = arith.constant 0 : index
    %c0_2 = arith.constant 0 : index
    %1 = vector.load %arg1[%c0_1, %c0_2] : memref<256x128xf32, #tpu.memory_space<vmem>>, vector<256x128xf32>
    %c0_3 = arith.constant 0 : index
    %c0_4 = arith.constant 0 : index
    %2 = vector.load %arg2[%c0_3, %c0_4] : memref<256x128xbf16, #tpu.memory_space<vmem>>, vector<256x128xbf16>
    %cst = arith.constant 6.000000e-01 : f32
    %3 = vector.broadcast %cst : f32 to vector<256x128xf32>
    %4 = arith.mulf %3, %1 : vector<256x128xf32>
    %c0_5 = arith.constant 0 : index
    %c0_6 = arith.constant 0 : index
    %5 = vector.load %arg0[%c0_5, %c0_6] : memref<256x256xbf16, #tpu.memory_space<vmem>>, vector<256x256xbf16>
    %cst_7 = arith.constant dense<0.000000e+00> : vector<256x128xf32>
    %6 = tpu.matmul %5, %2, %cst_7 {dimension_numbers = #tpu.dot_dimension_numbers<[1], [0], [0], [1], [0, 0, 1, 1], [], []>} : vector<256x256xbf16>, vector<256x128xbf16>, vector<256x128xf32> -> vector<256x128xf32>
    %7 = vector.broadcast %0 : vector<256x1xf32> to vector<256x128xf32>
    %8 = arith.mulf %7, %6 : vector<256x128xf32>
    %9 = arith.subf %1, %8 : vector<256x128xf32>
    %cst_8 = arith.constant 3.000000e-01 : f32
    %10 = vector.broadcast %cst_8 : f32 to vector<256x128xf32>
    %11 = arith.mulf %10, %9 : vector<256x128xf32>
    %12 = arith.addf %4, %11 : vector<256x128xf32>
    %13 = vector.broadcast %0 : vector<256x1xf32> to vector<256x128xf32>
    %14 = arith.mulf %13, %9 : vector<256x128xf32>
    %15 = arith.truncf %14 : vector<256x128xf32> to vector<256x128xbf16>
    %c0_9 = arith.constant 0 : index
    %c0_10 = arith.constant 0 : index
    %16 = vector.load %arg0[%c0_9, %c0_10] : memref<256x256xbf16, #tpu.memory_space<vmem>>, vector<256x256xbf16>
    %cst_11 = arith.constant dense<0.000000e+00> : vector<256x128xf32>
    %17 = tpu.matmul %16, %15, %cst_11 {dimension_numbers = #tpu.dot_dimension_numbers<[1], [0], [0], [1], [0, 0, 1, 1], [], []>} : vector<256x256xbf16>, vector<256x128xbf16>, vector<256x128xf32> -> vector<256x128xf32>
    %18 = vector.broadcast %0 : vector<256x1xf32> to vector<256x128xf32>
    %19 = arith.mulf %18, %17 : vector<256x128xf32>
    %20 = arith.subf %9, %19 : vector<256x128xf32>
    %cst_12 = arith.constant 1.000000e-01 : f32
    %21 = vector.broadcast %cst_12 : f32 to vector<256x128xf32>
    %22 = arith.mulf %21, %20 : vector<256x128xf32>
    %23 = arith.addf %12, %22 : vector<256x128xf32>
    %c0_13 = arith.constant 0 : index
    %c0_14 = arith.constant 0 : index
    %24 = vector.load %arg4[%c0_13, %c0_14] : memref<256x128xf32, #tpu.memory_space<vmem>>, vector<256x128xf32>
    tpu.vector_store %arg4[%c0_13, %c0_14], %23 {strides = array<i32>} : memref<256x128xf32, #tpu.memory_space<vmem>>, vector<256x128xf32>,
    return
  }
}

module attributes {stable_mosaic.version = 11 : i64} {
  func.func @prologue_kernel(%arg0: i32, %arg1: i32, %arg2: memref<256x256xf32, #tpu.memory_space<vmem>>, %arg3: memref<256x128xf32, #tpu.memory_space<vmem>>, %arg4: memref<256x256xbf16, #tpu.memory_space<vmem>>, %arg5: memref<256x1xf32, #tpu.memory_space<vmem>>, %arg6: memref<256x128xbf16, #tpu.memory_space<vmem>>, %arg7: memref<256x1xf32, #tpu.memory_space<vmem>>) attributes {dimension_semantics = [#tpu.dimension_semantics<parallel>, #tpu.dimension_semantics<arbitrary>], iteration_bounds = array<i64: 1, 1>, scalar_prefetch = 0 : i64, scratch_operands = 1 : i64, tpu.core_type = #tpu.core_type<tc>, window_params = [{transform_indices = @transform_0, window_bounds = array<i64: 256, 256>}, {transform_indices = @transform_1, window_bounds = array<i64: 256, 128>}, {transform_indices = @transform_2, window_bounds = array<i64: 256, 256>}, {transform_indices = @transform_3, window_bounds = array<i64: 256, 1>}, {transform_indices = @transform_4, window_bounds = array<i64: 256, 128>}]} {
    %c0_i32 = arith.constant 0 : i32
    %0 = arith.cmpi eq, %arg1, %c0_i32 : i32
    %1 = arith.extui %0 : i1 to i32
    %c0_i32_0 = arith.constant 0 : i32
    %2 = arith.cmpi ne, %1, %c0_i32_0 : i32
    scf.if %2 {
      %cst_10 = arith.constant 0.000000e+00 : f32
      %14 = vector.broadcast %cst_10 : f32 to vector<256x1xf32>
      %c0_11 = arith.constant 0 : index
      %c0_12 = arith.constant 0 : index
      %15 = vector.load %arg7[%c0_11, %c0_12] : memref<256x1xf32, #tpu.memory_space<vmem>>, vector<256x1xf32>
      tpu.vector_store %arg7[%c0_11, %c0_12], %14 {strides = array<i32>} : memref<256x1xf32, #tpu.memory_space<vmem>>, vector<256x1xf32>,
    } else {
    }
    %c0 = arith.constant 0 : index
    %c0_1 = arith.constant 0 : index
    %3 = vector.load %arg2[%c0, %c0_1] : memref<256x256xf32, #tpu.memory_space<vmem>>, vector<256x256xf32>
    %4 = arith.truncf %3 : vector<256x256xf32> to vector<256x256xbf16>
    %c0_2 = arith.constant 0 : index
    %c0_3 = arith.constant 0 : index
    %5 = vector.load %arg4[%c0_2, %c0_3] : memref<256x256xbf16, #tpu.memory_space<vmem>>, vector<256x256xbf16>
    tpu.vector_store %arg4[%c0_2, %c0_3], %4 {strides = array<i32>} : memref<256x256xbf16, #tpu.memory_space<vmem>>, vector<256x256xbf16>,
    %c0_4 = arith.constant 0 : index
    %c0_5 = arith.constant 0 : index
    %6 = vector.load %arg7[%c0_4, %c0_5] : memref<256x1xf32, #tpu.memory_space<vmem>>, vector<256x1xf32>
    %cst = arith.constant dense<0.000000e+00> : vector<256xf32>
    %7 = vector.multi_reduction <add>, %3, %cst [1] : vector<256x256xf32> to vector<256xf32>
    %8 = vector.shape_cast %7 : vector<256xf32> to vector<256x1xf32>
    %9 = arith.addf %6, %8 : vector<256x1xf32>
    %c0_6 = arith.constant 0 : index
    %c0_7 = arith.constant 0 : index
    %10 = vector.load %arg7[%c0_6, %c0_7] : memref<256x1xf32, #tpu.memory_space<vmem>>, vector<256x1xf32>
    tpu.vector_store %arg7[%c0_6, %c0_7], %9 {strides = array<i32>} : memref<256x1xf32, #tpu.memory_space<vmem>>, vector<256x1xf32>,
    %c0_i32_8 = arith.constant 0 : i32
    %11 = arith.cmpi eq, %arg1, %c0_i32_8 : i32
    %12 = arith.extui %11 : i1 to i32
    %c0_i32_9 = arith.constant 0 : i32
    %13 = arith.cmpi ne, %12, %c0_i32_9 : i32
    scf.if %13 {
      %c0_10 = arith.constant 0 : index
      %c0_11 = arith.constant 0 : index
      %14 = vector.load %arg7[%c0_10, %c0_11] : memref<256x1xf32, #tpu.memory_space<vmem>>, vector<256x1xf32>
      %cst_12 = arith.constant 1.000000e+00 : f32
      %15 = vector.broadcast %cst_12 : f32 to vector<256x1xf32>
      %16 = arith.maximumf %14, %15 : vector<256x1xf32>
      %17 = math.rsqrt %16 : vector<256x1xf32>
      %c0_13 = arith.constant 0 : index
      %c0_14 = arith.constant 0 : index
      %18 = vector.load %arg5[%c0_13, %c0_14] : memref<256x1xf32, #tpu.memory_space<vmem>>, vector<256x1xf32>
      tpu.vector_store %arg5[%c0_13, %c0_14], %17 {strides = array<i32>} : memref<256x1xf32, #tpu.memory_space<vmem>>, vector<256x1xf32>,
      %c0_15 = arith.constant 0 : index
      %c0_16 = arith.constant 0 : index
      %19 = vector.load %arg3[%c0_15, %c0_16] : memref<256x128xf32, #tpu.memory_space<vmem>>, vector<256x128xf32>
      %20 = vector.broadcast %17 : vector<256x1xf32> to vector<256x128xf32>
      %21 = arith.mulf %20, %19 : vector<256x128xf32>
      %22 = arith.truncf %21 : vector<256x128xf32> to vector<256x128xbf16>
      %c0_17 = arith.constant 0 : index
      %c0_18 = arith.constant 0 : index
      %23 = vector.load %arg6[%c0_17, %c0_18] : memref<256x128xbf16, #tpu.memory_space<vmem>>, vector<256x128xbf16>
      tpu.vector_store %arg6[%c0_17, %c0_18], %22 {strides = array<i32>} : memref<256x128xbf16, #tpu.memory_space<vmem>>, vector<256x128xbf16>,
    } else {
    }
    return
  }
  func.func @transform_0(%arg0: i32, %arg1: i32) -> (i32, i32) {
    %c0_i32 = arith.constant 0 : i32
    return %arg0, %arg1 : i32, i32
  }
  func.func @transform_1(%arg0: i32, %arg1: i32) -> (i32, i32) {
    %c0_i32 = arith.constant 0 : i32
    %c0_i32_0 = arith.constant 0 : i32
    return %arg0, %c0_i32 : i32, i32
  }
  func.func @transform_2(%arg0: i32, %arg1: i32) -> (i32, i32) {
    %c0_i32 = arith.constant 0 : i32
    return %arg0, %arg1 : i32, i32
  }
  func.func @transform_3(%arg0: i32, %arg1: i32) -> (i32, i32) {
    %c0_i32 = arith.constant 0 : i32
    %c0_i32_0 = arith.constant 0 : i32
    return %arg0, %c0_i32 : i32, i32
  }
  func.func @transform_4(%arg0: i32, %arg1: i32) -> (i32, i32) {
    %c0_i32 = arith.constant 0 : i32
    %c0_i32_0 = arith.constant 0 : i32
    return %arg0, %c0_i32 : i32, i32
  }
}

</mosaic_0001>

<llo_original>
// kernel: poly_conv_forward.3
$region0: #{poly_conv_forward.3}
  #allocation0 [shape = 'u32[]', space=smem, size = 0x4, offset = 0x4, fixed_abs, tag = 'smem constant byte address 0x4 - core index']
  #allocation1 [shape = 'u32[144,128]{1,0:T(1,128)}', space=vmem, size = 0x12000, scoped, tag = 'internal scratch']
  %s0 = inlined_call_operand.vmem [shape: bf16[256,256], index: 0, kind: input, shape index: {}]
  %s1 = inlined_call_operand.vmem [shape: f32[256,128], index: 1, kind: input, shape index: {}]
  %s2 = inlined_call_operand.vmem [shape: bf16[256,128], index: 2, kind: input, shape index: {}]
  %s3 = inlined_call_operand.vmem [shape: f32[256,1], index: 3, kind: input, shape index: {}]
  %s4 = inlined_call_operand.hbm [shape: f32[256,128], index: 4, kind: output, shape index: {}]
  %s5 = sld [smem:[#allocation0]]
  $region26: #{poly_conv_forward.3} parent=0
    _
  %s7 = ssub.s32 1, %s5
  %s8 = scalar_select 0, %s7, %s5
  $region1: #{poly_conv_forward.3} parent=0
    #allocation2 [shape = 'u8[131072]{0}', space=vmem, size = 0x20000, scoped, tag = 'output window, operand 0, single buffered']
    #allocation3 [shape = 's32[1]{0}', space=sflag, size = 0x4, scoped, tag = 'scoped memory for poly_conv_forward.3']
    %9 = vsyncpa [#allocation3], 0
    // Predicated region
    $region2: #{poly_conv_forward.3} parent=1 // pred_check
      _
    $region3: #{poly_conv_forward.3} parent=1 // pred_check_branch
      %11 = sbr.rel (0) target = $region5
    $region4: #{poly_conv_forward.3} parent=1 // pred_region
      _
    $region5: #{poly_conv_forward.3} parent=1 // pred_fallthru
      _
    // Predicated region
    $region6: #{poly_conv_forward.3} parent=1 // pred_check
      _
    $region7: #{poly_conv_forward.3} parent=1 // pred_check_branch
      %13 = sbr.rel (0) target = $region9
    $region8: #{poly_conv_forward.3} parent=1 // pred_region
      _
    $region9: #{poly_conv_forward.3} parent=1 // pred_fallthru
      _
    // Predicated region
    $region10: #{poly_conv_forward.3} parent=1 // pred_check
      _
    $region11: #{poly_conv_forward.3} parent=1 // pred_check_branch
      %15 = sbr.rel (0) target = $region13
    $region12: #{poly_conv_forward.3} parent=1 // pred_region
      _
    $region13: #{poly_conv_forward.3} parent=1 // pred_fallthru
      _
    // Predicated region
    $region14: #{poly_conv_forward.3} parent=1 // pred_check
      _
    $region15: #{poly_conv_forward.3} parent=1 // pred_check_branch
      %17 = sbr.rel (0) target = $region17
    $region16: #{poly_conv_forward.3} parent=1 // pred_region
      _
    $region17: #{poly_conv_forward.3} parent=1 // pred_fallthru
      _
    %v19 = vld [vmem:[%s3] sm:$0xff]
    %v20 = vld [vmem:[%s3 + $0x8] sm:$0xff]
    %v21 = vld [vmem:[%s3 + $0x10] sm:$0xff]
    %v22 = vld [vmem:[%s3 + $0x18] sm:$0xff]
    %v23 = vld [vmem:[%s3 + $0x20] sm:$0xff]
    %v24 = vld [vmem:[%s3 + $0x28] sm:$0xff]
    %v25 = vld [vmem:[%s3 + $0x30] sm:$0xff]
    %v26 = vld [vmem:[%s3 + $0x38] sm:$0xff]
    %v27 = vld [vmem:[%s3 + $0x40] sm:$0xff]
    %v28 = vld [vmem:[%s3 + $0x48] sm:$0xff]
    %v29 = vld [vmem:[%s3 + $0x50] sm:$0xff]
    %v30 = vld [vmem:[%s3 + $0x58] sm:$0xff]
    %v31 = vld [vmem:[%s3 + $0x60] sm:$0xff]
    %v32 = vld [vmem:[%s3 + $0x68] sm:$0xff]
    %v33 = vld [vmem:[%s3 + $0x70] sm:$0xff]
    %v34 = vld [vmem:[%s3 + $0x78] sm:$0xff]
    %v35 = vld [vmem:[%s3 + $0x80] sm:$0xff]
    %v36 = vld [vmem:[%s3 + $0x88] sm:$0xff]
    %v37 = vld [vmem:[%s3 + $0x90] sm:$0xff]
    %v38 = vld [vmem:[%s3 + $0x98] sm:$0xff]
    %v39 = vld [vmem:[%s3 + $0xa0] sm:$0xff]
    %v40 = vld [vmem:[%s3 + $0xa8] sm:$0xff]
    %v41 = vld [vmem:[%s3 + $0xb0] sm:$0xff]
    %v42 = vld [vmem:[%s3 + $0xb8] sm:$0xff]
    %v43 = vld [vmem:[%s3 + $0xc0] sm:$0xff]
    %v44 = vld [vmem:[%s3 + $0xc8] sm:$0xff]
    %v45 = vld [vmem:[%s3 + $0xd0] sm:$0xff]
    %v46 = vld [vmem:[%s3 + $0xd8] sm:$0xff]
    %v47 = vld [vmem:[%s3 + $0xe0] sm:$0xff]
    %v48 = vld [vmem:[%s3 + $0xe8] sm:$0xff]
    %v49 = vld [vmem:[%s3 + $0xf0] sm:$0xff]
    %v50 = vld [vmem:[%s3 + $0xf8] sm:$0xff]
    %v51 = vld [vmem:[%s1] sm:$0xff]
    %v52 = vld [vmem:[%s1 + $0x8] sm:$0xff]
    %v53 = vld [vmem:[%s1 + $0x10] sm:$0xff]
    %v54 = vld [vmem:[%s1 + $0x18] sm:$0xff]
    %v55 = vld [vmem:[%s1 + $0x20] sm:$0xff]
    %v56 = vld [vmem:[%s1 + $0x28] sm:$0xff]
    %v57 = vld [vmem:[%s1 + $0x30] sm:$0xff]
    %v58 = vld [vmem:[%s1 + $0x38] sm:$0xff]
    %v59 = vld [vmem:[%s1 + $0x40] sm:$0xff]
    %v60 = vld [vmem:[%s1 + $0x48] sm:$0xff]
    %v61 = vld [vmem:[%s1 + $0x50] sm:$0xff]
    %v62 = vld [vmem:[%s1 + $0x58] sm:$0xff]
    %v63 = vld [vmem:[%s1 + $0x60] sm:$0xff]
    %v64 = vld [vmem:[%s1 + $0x68] sm:$0xff]
    %v65 = vld [vmem:[%s1 + $0x70] sm:$0xff]
    %v66 = vld [vmem:[%s1 + $0x78] sm:$0xff]
    %v67 = vld [vmem:[%s1 + $0x80] sm:$0xff]
    %v68 = vld [vmem:[%s1 + $0x88] sm:$0xff]
    %v69 = vld [vmem:[%s1 + $0x90] sm:$0xff]
    %v70 = vld [vmem:[%s1 + $0x98] sm:$0xff]
    %v71 = vld [vmem:[%s1 + $0xa0] sm:$0xff]
    %v72 = vld [vmem:[%s1 + $0xa8] sm:$0xff]
    %v73 = vld [vmem:[%s1 + $0xb0] sm:$0xff]
    %v74 = vld [vmem:[%s1 + $0xb8] sm:$0xff]
    %v75 = vld [vmem:[%s1 + $0xc0] sm:$0xff]
    %v76 = vld [vmem:[%s1 + $0xc8] sm:$0xff]
    %v77 = vld [vmem:[%s1 + $0xd0] sm:$0xff]
    %v78 = vld [vmem:[%s1 + $0xd8] sm:$0xff]
    %v79 = vld [vmem:[%s1 + $0xe0] sm:$0xff]
    %v80 = vld [vmem:[%s1 + $0xe8] sm:$0xff]
    %v81 = vld [vmem:[%s1 + $0xf0] sm:$0xff]
    %v82 = vld [vmem:[%s1 + $0xf8] sm:$0xff]
    %v83 = vld [vmem:[%s2] sm:$0xf]
    %v84 = vld [vmem:[%s2 + $0x4] sm:$0xf]
    %v85 = vld [vmem:[%s2 + $0x8] sm:$0xf]
    %v86 = vld [vmem:[%s2 + $0xc] sm:$0xf]
    %v87 = vld [vmem:[%s2 + $0x10] sm:$0xf]
    %v88 = vld [vmem:[%s2 + $0x14] sm:$0xf]
    %v89 = vld [vmem:[%s2 + $0x18] sm:$0xf]
    %v90 = vld [vmem:[%s2 + $0x1c] sm:$0xf]
    %v91 = vld [vmem:[%s2 + $0x20] sm:$0xf]
    %v92 = vld [vmem:[%s2 + $0x24] sm:$0xf]
    %v93 = vld [vmem:[%s2 + $0x28] sm:$0xf]
    %v94 = vld [vmem:[%s2 + $0x2c] sm:$0xf]
    %v95 = vld [vmem:[%s2 + $0x30] sm:$0xf]
    %v96 = vld [vmem:[%s2 + $0x34] sm:$0xf]
    %v97 = vld [vmem:[%s2 + $0x38] sm:$0xf]
    %v98 = vld [vmem:[%s2 + $0x3c] sm:$0xf]
    %v99 = vld [vmem:[%s2 + $0x40] sm:$0xf]
    %v100 = vld [vmem:[%s2 + $0x44] sm:$0xf]
    %v101 = vld [vmem:[%s2 + $0x48] sm:$0xf]
    %v102 = vld [vmem:[%s2 + $0x4c] sm:$0xf]
    %v103 = vld [vmem:[%s2 + $0x50] sm:$0xf]
    %v104 = vld [vmem:[%s2 + $0x54] sm:$0xf]
    %v105 = vld [vmem:[%s2 + $0x58] sm:$0xf]
    %v106 = vld [vmem:[%s2 + $0x5c] sm:$0xf]
    %v107 = vld [vmem:[%s2 + $0x60] sm:$0xf]
    %v108 = vld [vmem:[%s2 + $0x64] sm:$0xf]
    %v109 = vld [vmem:[%s2 + $0x68] sm:$0xf]
    %v110 = vld [vmem:[%s2 + $0x6c] sm:$0xf]
    %v111 = vld [vmem:[%s2 + $0x70] sm:$0xf]
    %v112 = vld [vmem:[%s2 + $0x74] sm:$0xf]
    %v113 = vld [vmem:[%s2 + $0x78] sm:$0xf]
    %v114 = vld [vmem:[%s2 + $0x7c] sm:$0xf]
    %v115 = vmul.f32 %v51, 0.6
    %v116 = vmul.f32 %v52, 0.6
    %v117 = vmul.f32 %v53, 0.6
    %v118 = vmul.f32 %v54, 0.6
    %v119 = vmul.f32 %v55, 0.6
    %v120 = vmul.f32 %v56, 0.6
    %v121 = vmul.f32 %v57, 0.6
    %v122 = vmul.f32 %v58, 0.6
    %v123 = vmul.f32 %v59, 0.6
    %v124 = vmul.f32 %v60, 0.6
    %v125 = vmul.f32 %v61, 0.6
    %v126 = vmul.f32 %v62, 0.6
    %v127 = vmul.f32 %v63, 0.6
    %v128 = vmul.f32 %v64, 0.6
    %v129 = vmul.f32 %v65, 0.6
    %v130 = vmul.f32 %v66, 0.6
    %v131 = vmul.f32 %v67, 0.6
    %v132 = vmul.f32 %v68, 0.6
    %v133 = vmul.f32 %v69, 0.6
    %v134 = vmul.f32 %v70, 0.6
    %v135 = vmul.f32 %v71, 0.6
    %v136 = vmul.f32 %v72, 0.6
    %v137 = vmul.f32 %v73, 0.6
    %v138 = vmul.f32 %v74, 0.6
    %v139 = vmul.f32 %v75, 0.6
    %v140 = vmul.f32 %v76, 0.6
    %v141 = vmul.f32 %v77, 0.6
    %v142 = vmul.f32 %v78, 0.6
    %v143 = vmul.f32 %v79, 0.6
    %v144 = vmul.f32 %v80, 0.6
    %v145 = vmul.f32 %v81, 0.6
    %v146 = vmul.f32 %v82, 0.6
    %v147 = vld [vmem:[%s0] sm:$0xff]
    %v148 = vld [vmem:[%s0 + $0x8] sm:$0xff]
    %v149 = vld [vmem:[%s0 + $0x10] sm:$0xff]
    %v150 = vld [vmem:[%s0 + $0x18] sm:$0xff]
    %v151 = vld [vmem:[%s0 + $0x20] sm:$0xff]
    %v152 = vld [vmem:[%s0 + $0x28] sm:$0xff]
    %v153 = vld [vmem:[%s0 + $0x30] sm:$0xff]
    %v154 = vld [vmem:[%s0 + $0x38] sm:$0xff]
    %v155 = vld [vmem:[%s0 + $0x40] sm:$0xff]
    %v156 = vld [vmem:[%s0 + $0x48] sm:$0xff]
    %v157 = vld [vmem:[%s0 + $0x50] sm:$0xff]
    %v158 = vld [vmem:[%s0 + $0x58] sm:$0xff]
    %v159 = vld [vmem:[%s0 + $0x60] sm:$0xff]
    %v160 = vld [vmem:[%s0 + $0x68] sm:$0xff]
    %v161 = vld [vmem:[%s0 + $0x70] sm:$0xff]
    %v162 = vld [vmem:[%s0 + $0x78] sm:$0xff]
    %v163 = vld [vmem:[%s0 + $0x80] sm:$0xff]
    %v164 = vld [vmem:[%s0 + $0x88] sm:$0xff]
    %v165 = vld [vmem:[%s0 + $0x90] sm:$0xff]
    %v166 = vld [vmem:[%s0 + $0x98] sm:$0xff]
    %v167 = vld [vmem:[%s0 + $0xa0] sm:$0xff]
    %v168 = vld [vmem:[%s0 + $0xa8] sm:$0xff]
    %v169 = vld [vmem:[%s0 + $0xb0] sm:$0xff]
    %v170 = vld [vmem:[%s0 + $0xb8] sm:$0xff]
    %v171 = vld [vmem:[%s0 + $0xc0] sm:$0xff]
    %v172 = vld [vmem:[%s0 + $0xc8] sm:$0xff]
    %v173 = vld [vmem:[%s0 + $0xd0] sm:$0xff]
    %v174 = vld [vmem:[%s0 + $0xd8] sm:$0xff]
    %v175 = vld [vmem:[%s0 + $0xe0] sm:$0xff]
    %v176 = vld [vmem:[%s0 + $0xe8] sm:$0xff]
    %v177 = vld [vmem:[%s0 + $0xf0] sm:$0xff]
    %v178 = vld [vmem:[%s0 + $0xf8] sm:$0xff]
    %v211 = vunpack.c.l.b16 %v147
    %v212 = vunpack.c.h.b16 %v147
    %v213 = vunpack.c.l.b16 %v148
    %v214 = vunpack.c.h.b16 %v148
    %v215 = vunpack.c.l.b16 %v149
    %v216 = vunpack.c.h.b16 %v149
    %v217 = vunpack.c.l.b16 %v150
    %v218 = vunpack.c.h.b16 %v150
    %v219 = vunpack.c.l.b16 %v151
    %v220 = vunpack.c.h.b16 %v151
    %v221 = vunpack.c.l.b16 %v152
    %v222 = vunpack.c.h.b16 %v152
    %v223 = vunpack.c.l.b16 %v153
    %v224 = vunpack.c.h.b16 %v153
    %v225 = vunpack.c.l.b16 %v154
    %v226 = vunpack.c.h.b16 %v154
    %v227 = vunpack.c.l.b16 %v155
    %v228 = vunpack.c.h.b16 %v155
    %v229 = vunpack.c.l.b16 %v156
    %v230 = vunpack.c.h.b16 %v156
    %v231 = vunpack.c.l.b16 %v157
    %v232 = vunpack.c.h.b16 %v157
    %v233 = vunpack.c.l.b16 %v158
    %v234 = vunpack.c.h.b16 %v158
    %v235 = vunpack.c.l.b16 %v159
    %v236 = vunpack.c.h.b16 %v159
    %v237 = vunpack.c.l.b16 %v160
    %v238 = vunpack.c.h.b16 %v160
    %v239 = vunpack.c.l.b16 %v161
    %v240 = vunpack.c.h.b16 %v161
    %v241 = vunpack.c.l.b16 %v162
    %v242 = vunpack.c.h.b16 %v162
    %v243 = vunpack.c.l.b16 %v163
    %v244 = vunpack.c.h.b16 %v163
    %v245 = vunpack.c.l.b16 %v164
    %v246 = vunpack.c.h.b16 %v164
    %v247 = vunpack.c.l.b16 %v165
    %v248 = vunpack.c.h.b16 %v165
    %v249 = vunpack.c.l.b16 %v166
    %v250 = vunpack.c.h.b16 %v166
    %v251 = vunpack.c.l.b16 %v167
    %v252 = vunpack.c.h.b16 %v167
    %v253 = vunpack.c.l.b16 %v168
    %v254 = vunpack.c.h.b16 %v168
    %v255 = vunpack.c.l.b16 %v169
    %v256 = vunpack.c.h.b16 %v169
    %v257 = vunpack.c.l.b16 %v170
    %v258 = vunpack.c.h.b16 %v170
    %v259 = vunpack.c.l.b16 %v171
    %v260 = vunpack.c.h.b16 %v171
    %v261 = vunpack.c.l.b16 %v172
    %v262 = vunpack.c.h.b16 %v172
    %v263 = vunpack.c.l.b16 %v173
    %v264 = vunpack.c.h.b16 %v173
    %v265 = vunpack.c.l.b16 %v174
    %v266 = vunpack.c.h.b16 %v174
    %v267 = vunpack.c.l.b16 %v175
    %v268 = vunpack.c.h.b16 %v175
    %v269 = vunpack.c.l.b16 %v176
    %v270 = vunpack.c.h.b16 %v176
    %v271 = vunpack.c.l.b16 %v177
    %v272 = vunpack.c.h.b16 %v177
    %v273 = vunpack.c.l.b16 %v178
    %v274 = vunpack.c.h.b16 %v178
    %v275 = vpack.c.b16 %v213, %v211
    %v276 = vpack.c.b16 %v214, %v212
    %v277 = vpack.c.b16 %v217, %v215
    %v278 = vpack.c.b16 %v218, %v216
    %v279 = vpack.c.b16 %v221, %v219
    %v280 = vpack.c.b16 %v222, %v220
    %v281 = vpack.c.b16 %v225, %v223
    %v282 = vpack.c.b16 %v226, %v224
    %v283 = vpack.c.b16 %v229, %v227
    %v284 = vpack.c.b16 %v230, %v228
    %v285 = vpack.c.b16 %v233, %v231
    %v286 = vpack.c.b16 %v234, %v232
    %v287 = vpack.c.b16 %v237, %v235
    %v288 = vpack.c.b16 %v238, %v236
    %v289 = vpack.c.b16 %v241, %v239
    %v290 = vpack.c.b16 %v242, %v240
    %v291 = vpack.c.b16 %v245, %v243
    %v292 = vpack.c.b16 %v246, %v244
    %v293 = vpack.c.b16 %v249, %v247
    %v294 = vpack.c.b16 %v250, %v248
    %v295 = vpack.c.b16 %v253, %v251
    %v296 = vpack.c.b16 %v254, %v252
    %v297 = vpack.c.b16 %v257, %v255
    %v298 = vpack.c.b16 %v258, %v256
    %v299 = vpack.c.b16 %v261, %v259
    %v300 = vpack.c.b16 %v262, %v260
    %v301 = vpack.c.b16 %v265, %v263
    %v302 = vpack.c.b16 %v266, %v264
    %v303 = vpack.c.b16 %v269, %v267
    %v304 = vpack.c.b16 %v270, %v268
    %v305 = vpack.c.b16 %v273, %v271
    %v306 = vpack.c.b16 %v274, %v272
    %v371 = vunpack.c.l.b16 %v83
    %v372 = vunpack.c.l.b16 %v84
    %v373 = vunpack.c.l.b16 %v85
    %v374 = vunpack.c.l.b16 %v86
    %v375 = vunpack.c.l.b16 %v87
    %v376 = vunpack.c.l.b16 %v88
    %v377 = vunpack.c.l.b16 %v89
    %v378 = vunpack.c.l.b16 %v90
    %v379 = vunpack.c.l.b16 %v91
    %v380 = vunpack.c.l.b16 %v92
    %v381 = vunpack.c.l.b16 %v93
    %v382 = vunpack.c.l.b16 %v94
    %v383 = vunpack.c.l.b16 %v95
    %v384 = vunpack.c.l.b16 %v96
    %v385 = vunpack.c.l.b16 %v97
    %v386 = vunpack.c.l.b16 %v98
    %v387 = vunpack.c.l.b16 %v99
    %v388 = vunpack.c.l.b16 %v100
    %v389 = vunpack.c.l.b16 %v101
    %v390 = vunpack.c.l.b16 %v102
    %v391 = vunpack.c.l.b16 %v103
    %v392 = vunpack.c.l.b16 %v104
    %v393 = vunpack.c.l.b16 %v105
    %v394 = vunpack.c.l.b16 %v106
    %v395 = vunpack.c.l.b16 %v107
    %v396 = vunpack.c.l.b16 %v108
    %v397 = vunpack.c.l.b16 %v109
    %v398 = vunpack.c.l.b16 %v110
    %v399 = vunpack.c.l.b16 %v111
    %v400 = vunpack.c.l.b16 %v112
    %v401 = vunpack.c.l.b16 %v113
    %v402 = vunpack.c.l.b16 %v114
    %v403 = vpack.c.b16 %v372, %v371
    %v404 = vpack.c.b16 %v374, %v373
    %v405 = vpack.c.b16 %v376, %v375
    %v406 = vpack.c.b16 %v378, %v377
    %v407 = vpack.c.b16 %v380, %v379
    %v408 = vpack.c.b16 %v382, %v381
    %v409 = vpack.c.b16 %v384, %v383
    %v410 = vpack.c.b16 %v386, %v385
    %v411 = vpack.c.b16 %v388, %v387
    %v412 = vpack.c.b16 %v390, %v389
    %v413 = vpack.c.b16 %v392, %v391
    %v414 = vpack.c.b16 %v394, %v393
    %v415 = vpack.c.b16 %v396, %v395
    %v416 = vpack.c.b16 %v398, %v397
    %v417 = vpack.c.b16 %v400, %v399
    %v418 = vpack.c.b16 %v402, %v401
    %435 = vmatprep.subr.bf16.mxu0 0
    %436 = vmatpush1.bf16.msra.mxu0 %v403
    %437 = vmatprep.subr.bf16.mxu0 0
    %438 = vmatpush1.bf16.msra.mxu0 %v404
    %439 = vmatprep.subr.bf16.mxu0 0
    %440 = vmatpush1.bf16.msra.mxu0 %v405
    %441 = vmatprep.subr.bf16.mxu0 0
    %442 = vmatpush1.bf16.msra.mxu0 %v406
    %443 = vmatprep.subr.bf16.mxu0 0
    %444 = vmatpush1.bf16.msra.mxu0 %v407
    %445 = vmatprep.subr.bf16.mxu0 0
    %446 = vmatpush1.bf16.msra.mxu0 %v408
    %447 = vmatprep.subr.bf16.mxu0 0
    %448 = vmatpush1.bf16.msra.mxu0 %v409
    %449 = vmatprep.subr.bf16.mxu0 0
    %450 = vmatpush1.bf16.msra.mxu0 %v410
    %451 = vmatprep.subr.bf16.mxu0 0
    %452 = vmatpush1.bf16.msra.mxu0 %v411
    %453 = vmatprep.subr.bf16.mxu0 0
    %454 = vmatpush1.bf16.msra.mxu0 %v412
    %455 = vmatprep.subr.bf16.mxu0 0
    %456 = vmatpush1.bf16.msra.mxu0 %v413
    %457 = vmatprep.subr.bf16.mxu0 0
    %458 = vmatpush1.bf16.msra.mxu0 %v414
    %459 = vmatprep.subr.bf16.mxu0 0
    %460 = vmatpush1.bf16.msra.mxu0 %v415
    %461 = vmatprep.subr.bf16.mxu0 0
    %462 = vmatpush1.bf16.msra.mxu0 %v416
    %463 = vmatprep.subr.bf16.mxu0 0
    %464 = vmatpush1.bf16.msra.mxu0 %v417
    %465 = vmatprep.subr.bf16.mxu0 0
    %466 = vmatpush1.bf16.msra.mxu0 %v418
    %467 = vmatprep.mubr.bf16.mxu0 %v276
    %468 = vmatmul.mubr.bf16.gmra.mrb[0].mxu0 %v275
    %v469 = vpop.f32.mrb[0].mxu0
    %v470 = vadd.f32 0.0, %v469
    %v471 = vpop.f32.mrb[0].mxu0
    %v472 = vpop.f32.mrb[0].mxu0
    %v473 = vadd.f32 0.0, %v472
    %v474 = vpop.f32.mrb[0].mxu0
    %475 = vmatprep.mubr.bf16.mxu0 %v278
    %476 = vmatmul.mubr.bf16.gmra.mrb[0].mxu0 %v277
    %v477 = vpop.f32.mrb[0].mxu0
    %v478 = vadd.f32 0.0, %v477
    %v479 = vpop.f32.mrb[0].mxu0
    %v480 = vpop.f32.mrb[0].mxu0
    %v481 = vadd.f32 0.0, %v480
    %v482 = vpop.f32.mrb[0].mxu0
    %483 = vmatprep.mubr.bf16.mxu0 %v280
    %484 = vmatmul.mubr.bf16.gmra.mrb[0].mxu0 %v279
    %v485 = vpop.f32.mrb[0].mxu0
    %v486 = vadd.f32 0.0, %v485
    %v487 = vpop.f32.mrb[0].mxu0
    %v488 = vpop.f32.mrb[0].mxu0
    %v489 = vadd.f32 0.0, %v488
    %v490 = vpop.f32.mrb[0].mxu0
    %491 = vmatprep.mubr.bf16.mxu0 %v282
    %492 = vmatmul.mubr.bf16.gmra.mrb[0].mxu0 %v281
    %v493 = vpop.f32.mrb[0].mxu0
    %v494 = vadd.f32 0.0, %v493
    %v495 = vpop.f32.mrb[0].mxu0
    %v496 = vpop.f32.mrb[0].mxu0
    %v497 = vadd.f32 0.0, %v496
    %v498 = vpop.f32.mrb[0].mxu0
    %499 = vmatprep.mubr.bf16.mxu0 %v284
    %500 = vmatmul.mubr.bf16.gmra.mrb[0].mxu0 %v283
    %v501 = vpop.f32.mrb[0].mxu0
    %v502 = vadd.f32 0.0, %v501
    %v503 = vpop.f32.mrb[0].mxu0
    %v504 = vpop.f32.mrb[0].mxu0
    %v505 = vadd.f32 0.0, %v504
    %v506 = vpop.f32.mrb[0].mxu0
    %507 = vmatprep.mubr.bf16.mxu0 %v286
    %508 = vmatmul.mubr.bf16.gmra.mrb[0].mxu0 %v285
    %v509 = vpop.f32.mrb[0].mxu0
    %v510 = vadd.f32 0.0, %v509
    %v511 = vpop.f32.mrb[0].mxu0
    %v512 = vpop.f32.mrb[0].mxu0
    %v513 = vadd.f32 0.0, %v512
    %v514 = vpop.f32.mrb[0].mxu0
    %515 = vmatprep.mubr.bf16.mxu0 %v288
    %516 = vmatmul.mubr.bf16.gmra.mrb[0].mxu0 %v287
    %v517 = vpop.f32.mrb[0].mxu0
    %v518 = vadd.f32 0.0, %v517
    %v519 = vpop.f32.mrb[0].mxu0
    %v520 = vpop.f32.mrb[0].mxu0
    %v521 = vadd.f32 0.0, %v520
    %v522 = vpop.f32.mrb[0].mxu0
    %523 = vmatprep.mubr.bf16.mxu0 %v290
    %524 = vmatmul.mubr.bf16.gmra.mrb[0].mxu0 %v289
    %v525 = vpop.f32.mrb[0].mxu0
    %v526 = vadd.f32 0.0, %v525
    %v527 = vpop.f32.mrb[0].mxu0
    %v528 = vpop.f32.mrb[0].mxu0
    %v529 = vadd.f32 0.0, %v528
    %v530 = vpop.f32.mrb[0].mxu0
    %531 = vmatprep.mubr.bf16.mxu0 %v292
    %532 = vmatmul.mubr.bf16.gmra.mrb[0].mxu0 %v291
    %v533 = vpop.f32.mrb[0].mxu0
    %v534 = vadd.f32 0.0, %v533
    %v535 = vpop.f32.mrb[0].mxu0
    %v536 = vpop.f32.mrb[0].mxu0
    %v537 = vadd.f32 0.0, %v536
    %v538 = vpop.f32.mrb[0].mxu0
    %539 = vmatprep.mubr.bf16.mxu0 %v294
    %540 = vmatmul.mubr.bf16.gmra.mrb[0].mxu0 %v293
    %v541 = vpop.f32.mrb[0].mxu0
    %v542 = vadd.f32 0.0, %v541
    %v543 = vpop.f32.mrb[0].mxu0
    %v544 = vpop.f32.mrb[0].mxu0
    %v545 = vadd.f32 0.0, %v544
    %v546 = vpop.f32.mrb[0].mxu0
    %547 = vmatprep.mubr.bf16.mxu0 %v296
    %548 = vmatmul.mubr.bf16.gmra.mrb[0].mxu0 %v295
    %v549 = vpop.f32.mrb[0].mxu0
    %v550 = vadd.f32 0.0, %v549
    %v551 = vpop.f32.mrb[0].mxu0
    %v552 = vpop.f32.mrb[0].mxu0
    %v553 = vadd.f32 0.0, %v552
    %v554 = vpop.f32.mrb[0].mxu0
    %555 = vmatprep.mubr.bf16.mxu0 %v298
    %556 = vmatmul.mubr.bf16.gmra.mrb[0].mxu0 %v297
    %v557 = vpop.f32.mrb[0].mxu0
    %v558 = vadd.f32 0.0, %v557
    %v559 = vpop.f32.mrb[0].mxu0
    %v560 = vpop.f32.mrb[0].mxu0
    %v561 = vadd.f32 0.0, %v560
    %v562 = vpop.f32.mrb[0].mxu0
    %563 = vmatprep.mubr.bf16.mxu0 %v300
    %564 = vmatmul.mubr.bf16.gmra.mrb[0].mxu0 %v299
    %v565 = vpop.f32.mrb[0].mxu0
    %v566 = vadd.f32 0.0, %v565
    %v567 = vpop.f32.mrb[0].mxu0
    %v568 = vpop.f32.mrb[0].mxu0
    %v569 = vadd.f32 0.0, %v568
    %v570 = vpop.f32.mrb[0].mxu0
    %571 = vmatprep.mubr.bf16.mxu0 %v302
    %572 = vmatmul.mubr.bf16.gmra.mrb[0].mxu0 %v301
    %v573 = vpop.f32.mrb[0].mxu0
    %v574 = vadd.f32 0.0, %v573
    %v575 = vpop.f32.mrb[0].mxu0
    %v576 = vpop.f32.mrb[0].mxu0
    %v577 = vadd.f32 0.0, %v576
    %v578 = vpop.f32.mrb[0].mxu0
    %579 = vmatprep.mubr.bf16.mxu0 %v304
    %580 = vmatmul.mubr.bf16.gmra.mrb[0].mxu0 %v303
    %v581 = vpop.f32.mrb[0].mxu0
    %v582 = vadd.f32 0.0, %v581
    %v583 = vpop.f32.mrb[0].mxu0
    %v584 = vpop.f32.mrb[0].mxu0
    %v585 = vadd.f32 0.0, %v584
    %v586 = vpop.f32.mrb[0].mxu0
    %587 = vmatprep.mubr.bf16.mxu0 %v306
    %588 = vmatmul.mubr.bf16.gmra.mrb[0].mxu0 %v305
    %v589 = vpop.f32.mrb[0].mxu0
    %v590 = vadd.f32 0.0, %v589
    %v591 = vpop.f32.mrb[0].mxu0
    %v592 = vpop.f32.mrb[0].mxu0
    %v593 = vadd.f32 0.0, %v592
    %v594 = vpop.f32.mrb[0].mxu0
    %595 = vdwg.mxu0
    %597 = vset.pattern.permute.xlu0 0
    %598 = vperm.xlu0 %597, %v19
    %v599 = vpop.permute.xlu0 %598
    %602 = vset.pattern.permute.xlu0 0
    %603 = vperm.xlu0 %602, %v20
    %v604 = vpop.permute.xlu0 %603
    %607 = vset.pattern.permute.xlu0 0
    %608 = vperm.xlu0 %607, %v21
    %v609 = vpop.permute.xlu0 %608
    %612 = vset.pattern.permute.xlu0 0
    %613 = vperm.xlu0 %612, %v22
    %v614 = vpop.permute.xlu0 %613
    %617 = vset.pattern.permute.xlu0 0
    %618 = vperm.xlu0 %617, %v23
    %v619 = vpop.permute.xlu0 %618
    %622 = vset.pattern.permute.xlu0 0
    %623 = vperm.xlu0 %622, %v24
    %v624 = vpop.permute.xlu0 %623
    %627 = vset.pattern.permute.xlu0 0
    %628 = vperm.xlu0 %627, %v25
    %v629 = vpop.permute.xlu0 %628
    %632 = vset.pattern.permute.xlu0 0
    %633 = vperm.xlu0 %632, %v26
    %v634 = vpop.permute.xlu0 %633
    %637 = vset.pattern.permute.xlu0 0
    %638 = vperm.xlu0 %637, %v27
    %v639 = vpop.permute.xlu0 %638
    %642 = vset.pattern.permute.xlu0 0
    %643 = vperm.xlu0 %642, %v28
    %v644 = vpop.permute.xlu0 %643
    %647 = vset.pattern.permute.xlu0 0
    %648 = vperm.xlu0 %647, %v29
    %v649 = vpop.permute.xlu0 %648
    %652 = vset.pattern.permute.xlu0 0
    %653 = vperm.xlu0 %652, %v30
    %v654 = vpop.permute.xlu0 %653
    %657 = vset.pattern.permute.xlu0 0
    %658 = vperm.xlu0 %657, %v31
    %v659 = vpop.permute.xlu0 %658
    %662 = vset.pattern.permute.xlu0 0
    %663 = vperm.xlu0 %662, %v32
    %v664 = vpop.permute.xlu0 %663
    %667 = vset.pattern.permute.xlu0 0
    %668 = vperm.xlu0 %667, %v33
    %v669 = vpop.permute.xlu0 %668
    %672 = vset.pattern.permute.xlu0 0
    %673 = vperm.xlu0 %672, %v34
    %v674 = vpop.permute.xlu0 %673
    %677 = vset.pattern.permute.xlu0 0
    %678 = vperm.xlu0 %677, %v35
    %v679 = vpop.permute.xlu0 %678
    %682 = vset.pattern.permute.xlu0 0
    %683 = vperm.xlu0 %682, %v36
    %v684 = vpop.permute.xlu0 %683
    %687 = vset.pattern.permute.xlu0 0
    %688 = vperm.xlu0 %687, %v37
    %v689 = vpop.permute.xlu0 %688
    %692 = vset.pattern.permute.xlu0 0
    %693 = vperm.xlu0 %692, %v38
    %v694 = vpop.permute.xlu0 %693
    %697 = vset.pattern.permute.xlu0 0
    %698 = vperm.xlu0 %697, %v39
    %v699 = vpop.permute.xlu0 %698
    %702 = vset.pattern.permute.xlu0 0
    %703 = vperm.xlu0 %702, %v40
    %v704 = vpop.permute.xlu0 %703
    %707 = vset.pattern.permute.xlu0 0
    %708 = vperm.xlu0 %707, %v41
    %v709 = vpop.permute.xlu0 %708
    %712 = vset.pattern.permute.xlu0 0
    %713 = vperm.xlu0 %712, %v42
    %v714 = vpop.permute.xlu0 %713
    %717 = vset.pattern.permute.xlu0 0
    %718 = vperm.xlu0 %717, %v43
    %v719 = vpop.permute.xlu0 %718
    %722 = vset.pattern.permute.xlu0 0
    %723 = vperm.xlu0 %722, %v44
    %v724 = vpop.permute.xlu0 %723
    %727 = vset.pattern.permute.xlu0 0
    %728 = vperm.xlu0 %727, %v45
    %v729 = vpop.permute.xlu0 %728
    %732 = vset.pattern.permute.xlu0 0
    %733 = vperm.xlu0 %732, %v46
    %v734 = vpop.permute.xlu0 %733
    %737 = vset.pattern.permute.xlu0 0
    %738 = vperm.xlu0 %737, %v47
    %v739 = vpop.permute.xlu0 %738
    %742 = vset.pattern.permute.xlu0 0
    %743 = vperm.xlu0 %742, %v48
    %v744 = vpop.permute.xlu0 %743
    %747 = vset.pattern.permute.xlu0 0
    %748 = vperm.xlu0 %747, %v49
    %v749 = vpop.permute.xlu0 %748
    %752 = vset.pattern.permute.xlu0 0
    %753 = vperm.xlu0 %752, %v50
    %v754 = vpop.permute.xlu0 %753
    %v756 = vmul.f32 %v599, %v470
    %v757 = vmul.f32 %v604, %v473
    %v758 = vmul.f32 %v609, %v478
    %v759 = vmul.f32 %v614, %v481
    %v760 = vmul.f32 %v619, %v486
    %v761 = vmul.f32 %v624, %v489
    %v762 = vmul.f32 %v629, %v494
    %v763 = vmul.f32 %v634, %v497
    %v764 = vmul.f32 %v639, %v502
    %v765 = vmul.f32 %v644, %v505
    %v766 = vmul.f32 %v649, %v510
    %v767 = vmul.f32 %v654, %v513
    %v768 = vmul.f32 %v659, %v518
    %v769 = vmul.f32 %v664, %v521
    %v770 = vmul.f32 %v669, %v526
    %v771 = vmul.f32 %v674, %v529
    %v772 = vmul.f32 %v679, %v534
    %v773 = vmul.f32 %v684, %v537
    %v774 = vmul.f32 %v689, %v542
    %v775 = vmul.f32 %v694, %v545
    %v776 = vmul.f32 %v699, %v550
    %v777 = vmul.f32 %v704, %v553
    %v778 = vmul.f32 %v709, %v558
    %v779 = vmul.f32 %v714, %v561
    %v780 = vmul.f32 %v719, %v566
    %v781 = vmul.f32 %v724, %v569
    %v782 = vmul.f32 %v729, %v574
    %v783 = vmul.f32 %v734, %v577
    %v784 = vmul.f32 %v739, %v582
    %v785 = vmul.f32 %v744, %v585
    %v786 = vmul.f32 %v749, %v590
    %v787 = vmul.f32 %v754, %v593
    %v788 = vsub.f32 %v51, %v756
    %v789 = vsub.f32 %v52, %v757
    %v790 = vsub.f32 %v53, %v758
    %v791 = vsub.f32 %v54, %v759
    %v792 = vsub.f32 %v55, %v760
    %v793 = vsub.f32 %v56, %v761
    %v794 = vsub.f32 %v57, %v762
    %v795 = vsub.f32 %v58, %v763
    %v796 = vsub.f32 %v59, %v764
    %v797 = vsub.f32 %v60, %v765
    %v798 = vsub.f32 %v61, %v766
    %v799 = vsub.f32 %v62, %v767
    %v800 = vsub.f32 %v63, %v768
    %v801 = vsub.f32 %v64, %v769
    %v802 = vsub.f32 %v65, %v770
    %v803 = vsub.f32 %v66, %v771
    %v804 = vsub.f32 %v67, %v772
    %v805 = vsub.f32 %v68, %v773
    %v806 = vsub.f32 %v69, %v774
    %v807 = vsub.f32 %v70, %v775
    %v808 = vsub.f32 %v71, %v776
    %v809 = vsub.f32 %v72, %v777
    %v810 = vsub.f32 %v73, %v778
    %v811 = vsub.f32 %v74, %v779
    %v812 = vsub.f32 %v75, %v780
    %v813 = vsub.f32 %v76, %v781
    %v814 = vsub.f32 %v77, %v782
    %v815 = vsub.f32 %v78, %v783
    %v816 = vsub.f32 %v79, %v784
    %v817 = vsub.f32 %v80, %v785
    %v818 = vsub.f32 %v81, %v786
    %v819 = vsub.f32 %v82, %v787
    %v820 = vmul.f32 %v788, 0.3
    %v821 = vmul.f32 %v789, 0.3
    %v822 = vmul.f32 %v790, 0.3
    %v823 = vmul.f32 %v791, 0.3
    %v824 = vmul.f32 %v792, 0.3
    %v825 = vmul.f32 %v793, 0.3
    %v826 = vmul.f32 %v794, 0.3
    %v827 = vmul.f32 %v795, 0.3
    %v828 = vmul.f32 %v796, 0.3
    %v829 = vmul.f32 %v797, 0.3
    %v830 = vmul.f32 %v798, 0.3
    %v831 = vmul.f32 %v799, 0.3
    %v832 = vmul.f32 %v800, 0.3
    %v833 = vmul.f32 %v801, 0.3
    %v834 = vmul.f32 %v802, 0.3
    %v835 = vmul.f32 %v803, 0.3
    %v836 = vmul.f32 %v804, 0.3
    %v837 = vmul.f32 %v805, 0.3
    %v838 = vmul.f32 %v806, 0.3
    %v839 = vmul.f32 %v807, 0.3
    %v840 = vmul.f32 %v808, 0.3
    %v841 = vmul.f32 %v809, 0.3
    %v842 = vmul.f32 %v810, 0.3
    %v843 = vmul.f32 %v811, 0.3
    %v844 = vmul.f32 %v812, 0.3
    %v845 = vmul.f32 %v813, 0.3
    %v846 = vmul.f32 %v814, 0.3
    %v847 = vmul.f32 %v815, 0.3
    %v848 = vmul.f32 %v816, 0.3
    %v849 = vmul.f32 %v817, 0.3
    %v850 = vmul.f32 %v818, 0.3
    %v851 = vmul.f32 %v819, 0.3
    %v852 = vadd.f32 %v115, %v820
    %v853 = vadd.f32 %v116, %v821
    %v854 = vadd.f32 %v117, %v822
    %v855 = vadd.f32 %v118, %v823
    %v856 = vadd.f32 %v119, %v824
    %v857 = vadd.f32 %v120, %v825
    %v858 = vadd.f32 %v121, %v826
    %v859 = vadd.f32 %v122, %v827
    %v860 = vadd.f32 %v123, %v828
    %v861 = vadd.f32 %v124, %v829
    %v862 = vadd.f32 %v125, %v830
    %v863 = vadd.f32 %v126, %v831
    %v864 = vadd.f32 %v127, %v832
    %v865 = vadd.f32 %v128, %v833
    %v866 = vadd.f32 %v129, %v834
    %v867 = vadd.f32 %v130, %v835
    %v868 = vadd.f32 %v131, %v836
    %v869 = vadd.f32 %v132, %v837
    %v870 = vadd.f32 %v133, %v838
    %v871 = vadd.f32 %v134, %v839
    %v872 = vadd.f32 %v135, %v840
    %v873 = vadd.f32 %v136, %v841
    %v874 = vadd.f32 %v137, %v842
    %v875 = vadd.f32 %v138, %v843
    %v876 = vadd.f32 %v139, %v844
    %v877 = vadd.f32 %v140, %v845
    %v878 = vadd.f32 %v141, %v846
    %v879 = vadd.f32 %v142, %v847
    %v880 = vadd.f32 %v143, %v848
    %v881 = vadd.f32 %v144, %v849
    %v882 = vadd.f32 %v145, %v850
    %v883 = vadd.f32 %v146, %v851
    %v884 = vmul.f32 %v599, %v788
    %v885 = vmul.f32 %v604, %v789
    %v886 = vmul.f32 %v609, %v790
    %v887 = vmul.f32 %v614, %v791
    %v888 = vmul.f32 %v619, %v792
    %v889 = vmul.f32 %v624, %v793
    %v890 = vmul.f32 %v629, %v794
    %v891 = vmul.f32 %v634, %v795
    %v892 = vmul.f32 %v639, %v796
    %v893 = vmul.f32 %v644, %v797
    %v894 = vmul.f32 %v649, %v798
    %v895 = vmul.f32 %v654, %v799
    %v896 = vmul.f32 %v659, %v800
    %v897 = vmul.f32 %v664, %v801
    %v898 = vmul.f32 %v669, %v802
    %v899 = vmul.f32 %v674, %v803
    %v900 = vmul.f32 %v679, %v804
    %v901 = vmul.f32 %v684, %v805
    %v902 = vmul.f32 %v689, %v806
    %v903 = vmul.f32 %v694, %v807
    %v904 = vmul.f32 %v699, %v808
    %v905 = vmul.f32 %v704, %v809
    %v906 = vmul.f32 %v709, %v810
    %v907 = vmul.f32 %v714, %v811
    %v908 = vmul.f32 %v719, %v812
    %v909 = vmul.f32 %v724, %v813
    %v910 = vmul.f32 %v729, %v814
    %v911 = vmul.f32 %v734, %v815
    %v912 = vmul.f32 %v739, %v816
    %v913 = vmul.f32 %v744, %v817
    %v914 = vmul.f32 %v749, %v818
    %v915 = vmul.f32 %v754, %v819
    %v916 = vpack.c.bf16 %v885, %v884
    %v917 = vpack.c.bf16 %v887, %v886
    %v918 = vpack.c.bf16 %v889, %v888
    %v919 = vpack.c.bf16 %v891, %v890
    %v920 = vpack.c.bf16 %v893, %v892
    %v921 = vpack.c.bf16 %v895, %v894
    %v922 = vpack.c.bf16 %v897, %v896
    %v923 = vpack.c.bf16 %v899, %v898
    %v924 = vpack.c.bf16 %v901, %v900
    %v925 = vpack.c.bf16 %v903, %v902
    %v926 = vpack.c.bf16 %v905, %v904
    %v927 = vpack.c.bf16 %v907, %v906
    %v928 = vpack.c.bf16 %v909, %v908
    %v929 = vpack.c.bf16 %v911, %v910
    %v930 = vpack.c.bf16 %v913, %v912
    %v931 = vpack.c.bf16 %v915, %v914
    %932 = vmatprep.subr.bf16.mxu0 0
    %933 = vmatpush1.bf16.msra.mxu0 %v916
    %934 = vmatprep.subr.bf16.mxu0 0
    %935 = vmatpush1.bf16.msra.mxu0 %v917
    %936 = vmatprep.subr.bf16.mxu0 0
    %937 = vmatpush1.bf16.msra.mxu0 %v918
    %938 = vmatprep.subr.bf16.mxu0 0
    %939 = vmatpush1.bf16.msra.mxu0 %v919
    %940 = vmatprep.subr.bf16.mxu0 0
    %941 = vmatpush1.bf16.msra.mxu0 %v920
    %942 = vmatprep.subr.bf16.mxu0 0
    %943 = vmatpush1.bf16.msra.mxu0 %v921
    %944 = vmatprep.subr.bf16.mxu0 0
    %945 = vmatpush1.bf16.msra.mxu0 %v922
    %946 = vmatprep.subr.bf16.mxu0 0
    %947 = vmatpush1.bf16.msra.mxu0 %v923
    %948 = vmatprep.subr.bf16.mxu0 0
    %949 = vmatpush1.bf16.msra.mxu0 %v924
    %950 = vmatprep.subr.bf16.mxu0 0
    %951 = vmatpush1.bf16.msra.mxu0 %v925
    %952 = vmatprep.subr.bf16.mxu0 0
    %953 = vmatpush1.bf16.msra.mxu0 %v926
    %954 = vmatprep.subr.bf16.mxu0 0
    %955 = vmatpush1.bf16.msra.mxu0 %v927
    %956 = vmatprep.subr.bf16.mxu0 0
    %957 = vmatpush1.bf16.msra.mxu0 %v928
    %958 = vmatprep.subr.bf16.mxu0 0
    %959 = vmatpush1.bf16.msra.mxu0 %v929
    %960 = vmatprep.subr.bf16.mxu0 0
    %961 = vmatpush1.bf16.msra.mxu0 %v930
    %962 = vmatprep.subr.bf16.mxu0 0
    %963 = vmatpush1.bf16.msra.mxu0 %v931
    %964 = vmatprep.mubr.bf16.mxu0 %v276
    %965 = vmatmul.mubr.bf16.gmra.mrb[0].mxu0 %v275
    %v966 = vpop.f32.mrb[0].mxu0
    %v967 = vadd.f32 0.0, %v966
    %v968 = vpop.f32.mrb[0].mxu0
    %v969 = vpop.f32.mrb[0].mxu0
    %v970 = vadd.f32 0.0, %v969
    %v971 = vpop.f32.mrb[0].mxu0
    %972 = vmatprep.mubr.bf16.mxu0 %v278
    %973 = vmatmul.mubr.bf16.gmra.mrb[0].mxu0 %v277
    %v974 = vpop.f32.mrb[0].mxu0
    %v975 = vadd.f32 0.0, %v974
    %v976 = vpop.f32.mrb[0].mxu0
    %v977 = vpop.f32.mrb[0].mxu0
    %v978 = vadd.f32 0.0, %v977
    %v979 = vpop.f32.mrb[0].mxu0
    %980 = vmatprep.mubr.bf16.mxu0 %v280
    %981 = vmatmul.mubr.bf16.gmra.mrb[0].mxu0 %v279
    %v982 = vpop.f32.mrb[0].mxu0
    %v983 = vadd.f32 0.0, %v982
    %v984 = vpop.f32.mrb[0].mxu0
    %v985 = vpop.f32.mrb[0].mxu0
    %v986 = vadd.f32 0.0, %v985
    %v987 = vpop.f32.mrb[0].mxu0
    %988 = vmatprep.mubr.bf16.mxu0 %v282
    %989 = vmatmul.mubr.bf16.gmra.mrb[0].mxu0 %v281
    %v990 = vpop.f32.mrb[0].mxu0
    %v991 = vadd.f32 0.0, %v990
    %v992 = vpop.f32.mrb[0].mxu0
    %v993 = vpop.f32.mrb[0].mxu0
    %v994 = vadd.f32 0.0, %v993
    %v995 = vpop.f32.mrb[0].mxu0
    %996 = vmatprep.mubr.bf16.mxu0 %v284
    %997 = vmatmul.mubr.bf16.gmra.mrb[0].mxu0 %v283
    %v998 = vpop.f32.mrb[0].mxu0
    %v999 = vadd.f32 0.0, %v998
    %v1000 = vpop.f32.mrb[0].mxu0
    %v1001 = vpop.f32.mrb[0].mxu0
    %v1002 = vadd.f32 0.0, %v1001
    %v1003 = vpop.f32.mrb[0].mxu0
    %1004 = vmatprep.mubr.bf16.mxu0 %v286
    %1005 = vmatmul.mubr.bf16.gmra.mrb[0].mxu0 %v285
    %v1006 = vpop.f32.mrb[0].mxu0
    %v1007 = vadd.f32 0.0, %v1006
    %v1008 = vpop.f32.mrb[0].mxu0
    %v1009 = vpop.f32.mrb[0].mxu0
    %v1010 = vadd.f32 0.0, %v1009
    %v1011 = vpop.f32.mrb[0].mxu0
    %1012 = vmatprep.mubr.bf16.mxu0 %v288
    %1013 = vmatmul.mubr.bf16.gmra.mrb[0].mxu0 %v287
    %v1014 = vpop.f32.mrb[0].mxu0
    %v1015 = vadd.f32 0.0, %v1014
    %v1016 = vpop.f32.mrb[0].mxu0
    %v1017 = vpop.f32.mrb[0].mxu0
    %v1018 = vadd.f32 0.0, %v1017
    %v1019 = vpop.f32.mrb[0].mxu0
    %1020 = vmatprep.mubr.bf16.mxu0 %v290
    %1021 = vmatmul.mubr.bf16.gmra.mrb[0].mxu0 %v289
    %v1022 = vpop.f32.mrb[0].mxu0
    %v1023 = vadd.f32 0.0, %v1022
    %v1024 = vpop.f32.mrb[0].mxu0
    %v1025 = vpop.f32.mrb[0].mxu0
    %v1026 = vadd.f32 0.0, %v1025
    %v1027 = vpop.f32.mrb[0].mxu0
    %1028 = vmatprep.mubr.bf16.mxu0 %v292
    %1029 = vmatmul.mubr.bf16.gmra.mrb[0].mxu0 %v291
    %v1030 = vpop.f32.mrb[0].mxu0
    %v1031 = vadd.f32 0.0, %v1030
    %v1032 = vpop.f32.mrb[0].mxu0
    %v1033 = vpop.f32.mrb[0].mxu0
    %v1034 = vadd.f32 0.0, %v1033
    %v1035 = vpop.f32.mrb[0].mxu0
    %1036 = vmatprep.mubr.bf16.mxu0 %v294
    %1037 = vmatmul.mubr.bf16.gmra.mrb[0].mxu0 %v293
    %v1038 = vpop.f32.mrb[0].mxu0
    %v1039 = vadd.f32 0.0, %v1038
    %v1040 = vpop.f32.mrb[0].mxu0
    %v1041 = vpop.f32.mrb[0].mxu0
    %v1042 = vadd.f32 0.0, %v1041
    %v1043 = vpop.f32.mrb[0].mxu0
    %1044 = vmatprep.mubr.bf16.mxu0 %v296
    %1045 = vmatmul.mubr.bf16.gmra.mrb[0].mxu0 %v295
    %v1046 = vpop.f32.mrb[0].mxu0
    %v1047 = vadd.f32 0.0, %v1046
    %v1048 = vpop.f32.mrb[0].mxu0
    %v1049 = vpop.f32.mrb[0].mxu0
    %v1050 = vadd.f32 0.0, %v1049
    %v1051 = vpop.f32.mrb[0].mxu0
    %1052 = vmatprep.mubr.bf16.mxu0 %v298
    %1053 = vmatmul.mubr.bf16.gmra.mrb[0].mxu0 %v297
    %v1054 = vpop.f32.mrb[0].mxu0
    %v1055 = vadd.f32 0.0, %v1054
    %v1056 = vpop.f32.mrb[0].mxu0
    %v1057 = vpop.f32.mrb[0].mxu0
    %v1058 = vadd.f32 0.0, %v1057
    %v1059 = vpop.f32.mrb[0].mxu0
    %1060 = vmatprep.mubr.bf16.mxu0 %v300
    %1061 = vmatmul.mubr.bf16.gmra.mrb[0].mxu0 %v299
    %v1062 = vpop.f32.mrb[0].mxu0
    %v1063 = vadd.f32 0.0, %v1062
    %v1064 = vpop.f32.mrb[0].mxu0
    %v1065 = vpop.f32.mrb[0].mxu0
    %v1066 = vadd.f32 0.0, %v1065
    %v1067 = vpop.f32.mrb[0].mxu0
    %1068 = vmatprep.mubr.bf16.mxu0 %v302
    %1069 = vmatmul.mubr.bf16.gmra.mrb[0].mxu0 %v301
    %v1070 = vpop.f32.mrb[0].mxu0
    %v1071 = vadd.f32 0.0, %v1070
    %v1072 = vpop.f32.mrb[0].mxu0
    %v1073 = vpop.f32.mrb[0].mxu0
    %v1074 = vadd.f32 0.0, %v1073
    %v1075 = vpop.f32.mrb[0].mxu0
    %1076 = vmatprep.mubr.bf16.mxu0 %v304
    %1077 = vmatmul.mubr.bf16.gmra.mrb[0].mxu0 %v303
    %v1078 = vpop.f32.mrb[0].mxu0
    %v1079 = vadd.f32 0.0, %v1078
    %v1080 = vpop.f32.mrb[0].mxu0
    %v1081 = vpop.f32.mrb[0].mxu0
    %v1082 = vadd.f32 0.0, %v1081
    %v1083 = vpop.f32.mrb[0].mxu0
    %1084 = vmatprep.mubr.bf16.mxu0 %v306
    %1085 = vmatmul.mubr.bf16.gmra.mrb[0].mxu0 %v305
    %v1086 = vpop.f32.mrb[0].mxu0
    %v1087 = vadd.f32 0.0, %v1086
    %v1088 = vpop.f32.mrb[0].mxu0
    %v1089 = vpop.f32.mrb[0].mxu0
    %v1090 = vadd.f32 0.0, %v1089
    %v1091 = vpop.f32.mrb[0].mxu0
    %1092 = vdwg.mxu0
    %v1093 = vmul.f32 %v599, %v967
    %v1094 = vmul.f32 %v604, %v970
    %v1095 = vmul.f32 %v609, %v975
    %v1096 = vmul.f32 %v614, %v978
    %v1097 = vmul.f32 %v619, %v983
    %v1098 = vmul.f32 %v624, %v986
    %v1099 = vmul.f32 %v629, %v991
    %v1100 = vmul.f32 %v634, %v994
    %v1101 = vmul.f32 %v639, %v999
    %v1102 = vmul.f32 %v644, %v1002
    %v1103 = vmul.f32 %v649, %v1007
    %v1104 = vmul.f32 %v654, %v1010
    %v1105 = vmul.f32 %v659, %v1015
    %v1106 = vmul.f32 %v664, %v1018
    %v1107 = vmul.f32 %v669, %v1023
    %v1108 = vmul.f32 %v674, %v1026
    %v1109 = vmul.f32 %v679, %v1031
    %v1110 = vmul.f32 %v684, %v1034
    %v1111 = vmul.f32 %v689, %v1039
    %v1112 = vmul.f32 %v694, %v1042
    %v1113 = vmul.f32 %v699, %v1047
    %v1114 = vmul.f32 %v704, %v1050
    %v1115 = vmul.f32 %v709, %v1055
    %v1116 = vmul.f32 %v714, %v1058
    %v1117 = vmul.f32 %v719, %v1063
    %v1118 = vmul.f32 %v724, %v1066
    %v1119 = vmul.f32 %v729, %v1071
    %v1120 = vmul.f32 %v734, %v1074
    %v1121 = vmul.f32 %v739, %v1079
    %v1122 = vmul.f32 %v744, %v1082
    %v1123 = vmul.f32 %v749, %v1087
    %v1124 = vmul.f32 %v754, %v1090
    %v1125 = vsub.f32 %v788, %v1093
    %v1126 = vsub.f32 %v789, %v1094
    %v1127 = vsub.f32 %v790, %v1095
    %v1128 = vsub.f32 %v791, %v1096
    %v1129 = vsub.f32 %v792, %v1097
    %v1130 = vsub.f32 %v793, %v1098
    %v1131 = vsub.f32 %v794, %v1099
    %v1132 = vsub.f32 %v795, %v1100
    %v1133 = vsub.f32 %v796, %v1101
    %v1134 = vsub.f32 %v797, %v1102
    %v1135 = vsub.f32 %v798, %v1103
    %v1136 = vsub.f32 %v799, %v1104
    %v1137 = vsub.f32 %v800, %v1105
    %v1138 = vsub.f32 %v801, %v1106
    %v1139 = vsub.f32 %v802, %v1107
    %v1140 = vsub.f32 %v803, %v1108
    %v1141 = vsub.f32 %v804, %v1109
    %v1142 = vsub.f32 %v805, %v1110
    %v1143 = vsub.f32 %v806, %v1111
    %v1144 = vsub.f32 %v807, %v1112
    %v1145 = vsub.f32 %v808, %v1113
    %v1146 = vsub.f32 %v809, %v1114
    %v1147 = vsub.f32 %v810, %v1115
    %v1148 = vsub.f32 %v811, %v1116
    %v1149 = vsub.f32 %v812, %v1117
    %v1150 = vsub.f32 %v813, %v1118
    %v1151 = vsub.f32 %v814, %v1119
    %v1152 = vsub.f32 %v815, %v1120
    %v1153 = vsub.f32 %v816, %v1121
    %v1154 = vsub.f32 %v817, %v1122
    %v1155 = vsub.f32 %v818, %v1123
    %v1156 = vsub.f32 %v819, %v1124
    %v1157 = vmul.f32 %v1125, 0.1
    %v1158 = vmul.f32 %v1126, 0.1
    %v1159 = vmul.f32 %v1127, 0.1
    %v1160 = vmul.f32 %v1128, 0.1
    %v1161 = vmul.f32 %v1129, 0.1
    %v1162 = vmul.f32 %v1130, 0.1
    %v1163 = vmul.f32 %v1131, 0.1
    %v1164 = vmul.f32 %v1132, 0.1
    %v1165 = vmul.f32 %v1133, 0.1
    %v1166 = vmul.f32 %v1134, 0.1
    %v1167 = vmul.f32 %v1135, 0.1
    %v1168 = vmul.f32 %v1136, 0.1
    %v1169 = vmul.f32 %v1137, 0.1
    %v1170 = vmul.f32 %v1138, 0.1
    %v1171 = vmul.f32 %v1139, 0.1
    %v1172 = vmul.f32 %v1140, 0.1
    %v1173 = vmul.f32 %v1141, 0.1
    %v1174 = vmul.f32 %v1142, 0.1
    %v1175 = vmul.f32 %v1143, 0.1
    %v1176 = vmul.f32 %v1144, 0.1
    %v1177 = vmul.f32 %v1145, 0.1
    %v1178 = vmul.f32 %v1146, 0.1
    %v1179 = vmul.f32 %v1147, 0.1
    %v1180 = vmul.f32 %v1148, 0.1
    %v1181 = vmul.f32 %v1149, 0.1
    %v1182 = vmul.f32 %v1150, 0.1
    %v1183 = vmul.f32 %v1151, 0.1
    %v1184 = vmul.f32 %v1152, 0.1
    %v1185 = vmul.f32 %v1153, 0.1
    %v1186 = vmul.f32 %v1154, 0.1
    %v1187 = vmul.f32 %v1155, 0.1
    %v1188 = vmul.f32 %v1156, 0.1
    %v1189 = vadd.f32 %v852, %v1157
    %v1190 = vadd.f32 %v853, %v1158
    %v1191 = vadd.f32 %v854, %v1159
    %v1192 = vadd.f32 %v855, %v1160
    %v1193 = vadd.f32 %v856, %v1161
    %v1194 = vadd.f32 %v857, %v1162
    %v1195 = vadd.f32 %v858, %v1163
    %v1196 = vadd.f32 %v859, %v1164
    %v1197 = vadd.f32 %v860, %v1165
    %v1198 = vadd.f32 %v861, %v1166
    %v1199 = vadd.f32 %v862, %v1167
    %v1200 = vadd.f32 %v863, %v1168
    %v1201 = vadd.f32 %v864, %v1169
    %v1202 = vadd.f32 %v865, %v1170
    %v1203 = vadd.f32 %v866, %v1171
    %v1204 = vadd.f32 %v867, %v1172
    %v1205 = vadd.f32 %v868, %v1173
    %v1206 = vadd.f32 %v869, %v1174
    %v1207 = vadd.f32 %v870, %v1175
    %v1208 = vadd.f32 %v871, %v1176
    %v1209 = vadd.f32 %v872, %v1177
    %v1210 = vadd.f32 %v873, %v1178
    %v1211 = vadd.f32 %v874, %v1179
    %v1212 = vadd.f32 %v875, %v1180
    %v1213 = vadd.f32 %v876, %v1181
    %v1214 = vadd.f32 %v877, %v1182
    %v1215 = vadd.f32 %v878, %v1183
    %v1216 = vadd.f32 %v879, %v1184
    %v1217 = vadd.f32 %v880, %v1185
    %v1218 = vadd.f32 %v881, %v1186
    %v1219 = vadd.f32 %v882, %v1187
    %v1220 = vadd.f32 %v883, %v1188
    %1221 = vst [vmem:[#allocation2] sm:$0xff] %v1189
    %1222 = vst [vmem:[#allocation2 + $0x8] sm:$0xff] %v1190
    %1223 = vst [vmem:[#allocation2 + $0x10] sm:$0xff] %v1191
    %1224 = vst [vmem:[#allocation2 + $0x18] sm:$0xff] %v1192
    %1225 = vst [vmem:[#allocation2 + $0x20] sm:$0xff] %v1193
    %1226 = vst [vmem:[#allocation2 + $0x28] sm:$0xff] %v1194
    %1227 = vst [vmem:[#allocation2 + $0x30] sm:$0xff] %v1195
    %1228 = vst [vmem:[#allocation2 + $0x38] sm:$0xff] %v1196
    %1229 = vst [vmem:[#allocation2 + $0x40] sm:$0xff] %v1197
    %1230 = vst [vmem:[#allocation2 + $0x48] sm:$0xff] %v1198
    %1231 = vst [vmem:[#allocation2 + $0x50] sm:$0xff] %v1199
    %1232 = vst [vmem:[#allocation2 + $0x58] sm:$0xff] %v1200
    %1233 = vst [vmem:[#allocation2 + $0x60] sm:$0xff] %v1201
    %1234 = vst [vmem:[#allocation2 + $0x68] sm:$0xff] %v1202
    %1235 = vst [vmem:[#allocation2 + $0x70] sm:$0xff] %v1203
    %1236 = vst [vmem:[#allocation2 + $0x78] sm:$0xff] %v1204
    %1237 = vst [vmem:[#allocation2 + $0x80] sm:$0xff] %v1205
    %1238 = vst [vmem:[#allocation2 + $0x88] sm:$0xff] %v1206
    %1239 = vst [vmem:[#allocation2 + $0x90] sm:$0xff] %v1207
    %1240 = vst [vmem:[#allocation2 + $0x98] sm:$0xff] %v1208
    %1241 = vst [vmem:[#allocation2 + $0xa0] sm:$0xff] %v1209
    %1242 = vst [vmem:[#allocation2 + $0xa8] sm:$0xff] %v1210
    %1243 = vst [vmem:[#allocation2 + $0xb0] sm:$0xff] %v1211
    %1244 = vst [vmem:[#allocation2 + $0xb8] sm:$0xff] %v1212
    %1245 = vst [vmem:[#allocation2 + $0xc0] sm:$0xff] %v1213
    %1246 = vst [vmem:[#allocation2 + $0xc8] sm:$0xff] %v1214
    %1247 = vst [vmem:[#allocation2 + $0xd0] sm:$0xff] %v1215
    %1248 = vst [vmem:[#allocation2 + $0xd8] sm:$0xff] %v1216
    %1249 = vst [vmem:[#allocation2 + $0xe0] sm:$0xff] %v1217
    %1250 = vst [vmem:[#allocation2 + $0xe8] sm:$0xff] %v1218
    %1251 = vst [vmem:[#allocation2 + $0xf0] sm:$0xff] %v1219
    %1252 = vst [vmem:[#allocation2 + $0xf8] sm:$0xff] %v1220
    // Predicated region
    $region18: #{poly_conv_forward.3} parent=1 // pred_check
      _
    $region19: #{poly_conv_forward.3} parent=1 // pred_check_branch
      %1254 = sbr.rel (0) target = $region21
    $region20: #{poly_conv_forward.3} parent=1 // pred_region
      %s1256 = ssub.s32 4096, 4096
      %1257 = vsyncadd [#allocation3], %s1256
      %s1258 = sshll.u32 [#allocation2], 4
      %s1259 = int_to_ptr.vmem [resolvable:$true] %s1258
      %1264 = dma.vmem_to_hbm [thread:$0]  %s1259, 4096, %s4, [#allocation3], 128, 128, 8
    $region21: #{poly_conv_forward.3} parent=1 // pred_fallthru
      _
    // Predicated region
    $region22: #{poly_conv_forward.3} parent=1 // pred_check
      _
    $region23: #{poly_conv_forward.3} parent=1 // pred_check_branch
      %1266 = sbr.rel (0) target = $region25
    $region24: #{poly_conv_forward.3} parent=1 // pred_region
      %1267 = dma.done [#allocation3], 4096
    $region25: #{poly_conv_forward.3} parent=1 // pred_fallthru
      _
    %1268 = vsyncpa [#allocation3], 1

// kernel: poly_conv_forward.2
$region0: #{poly_conv_forward.2}
  #allocation0 [shape = 'u32[]', space=smem, size = 0x4, offset = 0x4, fixed_abs, tag = 'smem constant byte address 0x4 - core index']
  #allocation1 [shape = 'u32[144,128]{1,0:T(1,128)}', space=vmem, size = 0x12000, scoped, tag = 'internal scratch']
  #allocation2 [shape = 'f32[256,1]{1,0:T(8,128)}', space=vmem, size = 0x20000, scoped, tag = 'scratch operand']
  %s0 = inlined_call_operand.hbm [shape: f32[256,256], index: 0, kind: input, shape index: {}]
  %s1 = inlined_call_operand.hbm [shape: f32[256,128], index: 1, kind: input, shape index: {}]
  %s2 = inlined_call_operand.vmem [shape: bf16[256,256], index: 2, kind: output, shape index: {0}]
  %s3 = inlined_call_operand.vmem [shape: f32[256,1], index: 3, kind: output, shape index: {1}]
  %s4 = inlined_call_operand.vmem [shape: bf16[256,128], index: 4, kind: output, shape index: {2}]
  %5 = xla_tuple %s2, %s3, %s4
  %s6 = sld [smem:[#allocation0]]
  $region50: #{poly_conv_forward.2} parent=0
    _
  %s8 = ssub.s32 1, %s6
  %s9 = scalar_select 0, %s8, %s6
  $region1: #{poly_conv_forward.2} parent=0
    #allocation3 [shape = 'u8[262144]{0}', space=vmem, size = 0x40000, scoped, tag = 'input window, operand 0, single buffered']
    #allocation4 [shape = 's32[1]{0}', space=sflag, size = 0x4, scoped, tag = 'scoped memory for poly_conv_forward.2']
    #allocation5 [shape = 'u8[131072]{0}', space=vmem, size = 0x20000, scoped, tag = 'input window, operand 1, single buffered']
    #allocation6 [shape = 's32[1]{0}', space=sflag, size = 0x4, scoped, tag = 'scoped memory for poly_conv_forward.2']
    %10 = vsyncpa [#allocation4], 0
    %11 = vsyncpa [#allocation6], 0
    // Predicated region
    $region2: #{poly_conv_forward.2} parent=1 // pred_check
      _
    $region3: #{poly_conv_forward.2} parent=1 // pred_check_branch
      %13 = sbr.rel (0) target = $region5
    $region4: #{poly_conv_forward.2} parent=1 // pred_region
      %s15 = ssub.s32 8192, 8192
      %16 = vsyncadd [#allocation4], %s15
      %s17 = sshll.u32 [#allocation3], 4
      %s18 = int_to_ptr.vmem [resolvable:$true] %s17
      %23 = dma.hbm_to_vmem [thread:$0]  %s0, 8192, %s18, [#allocation4], 256, 256, 16
    $region5: #{poly_conv_forward.2} parent=1 // pred_fallthru
      _
    // Predicated region
    $region6: #{poly_conv_forward.2} parent=1 // pred_check
      _
    $region7: #{poly_conv_forward.2} parent=1 // pred_check_branch
      %25 = sbr.rel (0) target = $region9
    $region8: #{poly_conv_forward.2} parent=1 // pred_region
      %s27 = ssub.s32 4096, 4096
      %28 = vsyncadd [#allocation6], %s27
      %s29 = sshll.u32 [#allocation5], 4
      %s30 = int_to_ptr.vmem [resolvable:$true] %s29
      %35 = dma.hbm_to_vmem [thread:$0]  %s1, 4096, %s30, [#allocation6], 128, 128, 8
    $region9: #{poly_conv_forward.2} parent=1 // pred_fallthru
      _
    // Predicated region
    $region10: #{poly_conv_forward.2} parent=1 // pred_check
      _
    $region11: #{poly_conv_forward.2} parent=1 // pred_check_branch
      %37 = sbr.rel (0) target = $region13
    $region12: #{poly_conv_forward.2} parent=1 // pred_region
      %38 = dma.done [#allocation4], 8192
    $region13: #{poly_conv_forward.2} parent=1 // pred_fallthru
      _
    // Predicated region
    $region14: #{poly_conv_forward.2} parent=1 // pred_check
      _
    $region15: #{poly_conv_forward.2} parent=1 // pred_check_branch
      %40 = sbr.rel (0) target = $region17
    $region16: #{poly_conv_forward.2} parent=1 // pred_region
      %41 = dma.done [#allocation6], 4096
    $region17: #{poly_conv_forward.2} parent=1 // pred_fallthru
      _
    %p42 = scmp.eq.s32.totalorder 0, 0
    // Predicated region
    $region18: #{poly_conv_forward.2} parent=1 // pred_check
      %p43 = pneg %p42
    $region19: #{poly_conv_forward.2} parent=1 // pred_check_branch
      %45 = sbr.rel (%p43) target = $region21
    $region20: #{poly_conv_forward.2} parent=1 // pred_region
      %vm46 = vcmask 7168
      %47 = vst.msk [vmem:[#allocation2] sm:$0xff] %vm46, 0.0
      %48 = vst.msk [vmem:[#allocation2 + $0x8] sm:$0xff] %vm46, 0.0
      %49 = vst.msk [vmem:[#allocation2 + $0x10] sm:$0xff] %vm46, 0.0
      %50 = vst.msk [vmem:[#allocation2 + $0x18] sm:$0xff] %vm46, 0.0
      %51 = vst.msk [vmem:[#allocation2 + $0x20] sm:$0xff] %vm46, 0.0
      %52 = vst.msk [vmem:[#allocation2 + $0x28] sm:$0xff] %vm46, 0.0
      %53 = vst.msk [vmem:[#allocation2 + $0x30] sm:$0xff] %vm46, 0.0
      %54 = vst.msk [vmem:[#allocation2 + $0x38] sm:$0xff] %vm46, 0.0
      %55 = vst.msk [vmem:[#allocation2 + $0x40] sm:$0xff] %vm46, 0.0
      %56 = vst.msk [vmem:[#allocation2 + $0x48] sm:$0xff] %vm46, 0.0
      %57 = vst.msk [vmem:[#allocation2 + $0x50] sm:$0xff] %vm46, 0.0
      %58 = vst.msk [vmem:[#allocation2 + $0x58] sm:$0xff] %vm46, 0.0
      %59 = vst.msk [vmem:[#allocation2 + $0x60] sm:$0xff] %vm46, 0.0
      %60 = vst.msk [vmem:[#allocation2 + $0x68] sm:$0xff] %vm46, 0.0
      %61 = vst.msk [vmem:[#allocation2 + $0x70] sm:$0xff] %vm46, 0.0
      %62 = vst.msk [vmem:[#allocation2 + $0x78] sm:$0xff] %vm46, 0.0
      %63 = vst.msk [vmem:[#allocation2 + $0x80] sm:$0xff] %vm46, 0.0
      %64 = vst.msk [vmem:[#allocation2 + $0x88] sm:$0xff] %vm46, 0.0
      %65 = vst.msk [vmem:[#allocation2 + $0x90] sm:$0xff] %vm46, 0.0
      %66 = vst.msk [vmem:[#allocation2 + $0x98] sm:$0xff] %vm46, 0.0
      %67 = vst.msk [vmem:[#allocation2 + $0xa0] sm:$0xff] %vm46, 0.0
      %68 = vst.msk [vmem:[#allocation2 + $0xa8] sm:$0xff] %vm46, 0.0
      %69 = vst.msk [vmem:[#allocation2 + $0xb0] sm:$0xff] %vm46, 0.0
      %70 = vst.msk [vmem:[#allocation2 + $0xb8] sm:$0xff] %vm46, 0.0
      %71 = vst.msk [vmem:[#allocation2 + $0xc0] sm:$0xff] %vm46, 0.0
      %72 = vst.msk [vmem:[#allocation2 + $0xc8] sm:$0xff] %vm46, 0.0
      %73 = vst.msk [vmem:[#allocation2 + $0xd0] sm:$0xff] %vm46, 0.0
      %74 = vst.msk [vmem:[#allocation2 + $0xd8] sm:$0xff] %vm46, 0.0
      %75 = vst.msk [vmem:[#allocation2 + $0xe0] sm:$0xff] %vm46, 0.0
      %76 = vst.msk [vmem:[#allocation2 + $0xe8] sm:$0xff] %vm46, 0.0
      %77 = vst.msk [vmem:[#allocation2 + $0xf0] sm:$0xff] %vm46, 0.0
      %78 = vst.msk [vmem:[#allocation2 + $0xf8] sm:$0xff] %vm46, 0.0
    $region21: #{poly_conv_forward.2} parent=1 // pred_fallthru
      _
    %v79 = vld [vmem:[#allocation3] sm:$0xff]
    %v80 = vld [vmem:[#allocation3 + $0x8] sm:$0xff]
    %v81 = vld [vmem:[#allocation3 + $0x10] sm:$0xff]
    %v82 = vld [vmem:[#allocation3 + $0x18] sm:$0xff]
    %v83 = vld [vmem:[#allocation3 + $0x20] sm:$0xff]
    %v84 = vld [vmem:[#allocation3 + $0x28] sm:$0xff]
    %v85 = vld [vmem:[#allocation3 + $0x30] sm:$0xff]
    %v86 = vld [vmem:[#allocation3 + $0x38] sm:$0xff]
    %v87 = vld [vmem:[#allocation3 + $0x40] sm:$0xff]
    %v88 = vld [vmem:[#allocation3 + $0x48] sm:$0xff]
    %v89 = vld [vmem:[#allocation3 + $0x50] sm:$0xff]
    %v90 = vld [vmem:[#allocation3 + $0x58] sm:$0xff]
    %v91 = vld [vmem:[#allocation3 + $0x60] sm:$0xff]
    %v92 = vld [vmem:[#allocation3 + $0x68] sm:$0xff]
    %v93 = vld [vmem:[#allocation3 + $0x70] sm:$0xff]
    %v94 = vld [vmem:[#allocation3 + $0x78] sm:$0xff]
    %v95 = vld [vmem:[#allocation3 + $0x80] sm:$0xff]
    %v96 = vld [vmem:[#allocation3 + $0x88] sm:$0xff]
    %v97 = vld [vmem:[#allocation3 + $0x90] sm:$0xff]
    %v98 = vld [vmem:[#allocation3 + $0x98] sm:$0xff]
    %v99 = vld [vmem:[#allocation3 + $0xa0] sm:$0xff]
    %v100 = vld [vmem:[#allocation3 + $0xa8] sm:$0xff]
    %v101 = vld [vmem:[#allocation3 + $0xb0] sm:$0xff]
    %v102 = vld [vmem:[#allocation3 + $0xb8] sm:$0xff]
    %v103 = vld [vmem:[#allocation3 + $0xc0] sm:$0xff]
    %v104 = vld [vmem:[#allocation3 + $0xc8] sm:$0xff]
    %v105 = vld [vmem:[#allocation3 + $0xd0] sm:$0xff]
    %v106 = vld [vmem:[#allocation3 + $0xd8] sm:$0xff]
    %v107 = vld [vmem:[#allocation3 + $0xe0] sm:$0xff]
    %v108 = vld [vmem:[#allocation3 + $0xe8] sm:$0xff]
    %v109 = vld [vmem:[#allocation3 + $0xf0] sm:$0xff]
    %v110 = vld [vmem:[#allocation3 + $0xf8] sm:$0xff]
    %v111 = vld [vmem:[#allocation3 + $0x100] sm:$0xff]
    %v112 = vld [vmem:[#allocation3 + $0x108] sm:$0xff]
    %v113 = vld [vmem:[#allocation3 + $0x110] sm:$0xff]
    %v114 = vld [vmem:[#allocation3 + $0x118] sm:$0xff]
    %v115 = vld [vmem:[#allocation3 + $0x120] sm:$0xff]
    %v116 = vld [vmem:[#allocation3 + $0x128] sm:$0xff]
    %v117 = vld [vmem:[#allocation3 + $0x130] sm:$0xff]
    %v118 = vld [vmem:[#allocation3 + $0x138] sm:$0xff]
    %v119 = vld [vmem:[#allocation3 + $0x140] sm:$0xff]
    %v120 = vld [vmem:[#allocation3 + $0x148] sm:$0xff]
    %v121 = vld [vmem:[#allocation3 + $0x150] sm:$0xff]
    %v122 = vld [vmem:[#allocation3 + $0x158] sm:$0xff]
    %v123 = vld [vmem:[#allocation3 + $0x160] sm:$0xff]
    %v124 = vld [vmem:[#allocation3 + $0x168] sm:$0xff]
    %v125 = vld [vmem:[#allocation3 + $0x170] sm:$0xff]
    %v126 = vld [vmem:[#allocation3 + $0x178] sm:$0xff]
    %v127 = vld [vmem:[#allocation3 + $0x180] sm:$0xff]
    %v128 = vld [vmem:[#allocation3 + $0x188] sm:$0xff]
    %v129 = vld [vmem:[#allocation3 + $0x190] sm:$0xff]
    %v130 = vld [vmem:[#allocation3 + $0x198] sm:$0xff]
    %v131 = vld [vmem:[#allocation3 + $0x1a0] sm:$0xff]
    %v132 = vld [vmem:[#allocation3 + $0x1a8] sm:$0xff]
    %v133 = vld [vmem:[#allocation3 + $0x1b0] sm:$0xff]
    %v134 = vld [vmem:[#allocation3 + $0x1b8] sm:$0xff]
    %v135 = vld [vmem:[#allocation3 + $0x1c0] sm:$0xff]
    %v136 = vld [vmem:[#allocation3 + $0x1c8] sm:$0xff]
    %v137 = vld [vmem:[#allocation3 + $0x1d0] sm:$0xff]
    %v138 = vld [vmem:[#allocation3 + $0x1d8] sm:$0xff]
    %v139 = vld [vmem:[#allocation3 + $0x1e0] sm:$0xff]
    %v140 = vld [vmem:[#allocation3 + $0x1e8] sm:$0xff]
    %v141 = vld [vmem:[#allocation3 + $0x1f0] sm:$0xff]
    %v142 = vld [vmem:[#allocation3 + $0x1f8] sm:$0xff]
    %v143 = vpack.c.bf16 %v81, %v79
    %v144 = vpack.c.bf16 %v82, %v80
    %v145 = vpack.c.bf16 %v85, %v83
    %v146 = vpack.c.bf16 %v86, %v84
    %v147 = vpack.c.bf16 %v89, %v87
    %v148 = vpack.c.bf16 %v90, %v88
    %v149 = vpack.c.bf16 %v93, %v91
    %v150 = vpack.c.bf16 %v94, %v92
    %v151 = vpack.c.bf16 %v97, %v95
    %v152 = vpack.c.bf16 %v98, %v96
    %v153 = vpack.c.bf16 %v101, %v99
    %v154 = vpack.c.bf16 %v102, %v100
    %v155 = vpack.c.bf16 %v105, %v103
    %v156 = vpack.c.bf16 %v106, %v104
    %v157 = vpack.c.bf16 %v109, %v107
    %v158 = vpack.c.bf16 %v110, %v108
    %v159 = vpack.c.bf16 %v113, %v111
    %v160 = vpack.c.bf16 %v114, %v112
    %v161 = vpack.c.bf16 %v117, %v115
    %v162 = vpack.c.bf16 %v118, %v116
    %v163 = vpack.c.bf16 %v121, %v119
    %v164 = vpack.c.bf16 %v122, %v120
    %v165 = vpack.c.bf16 %v125, %v123
    %v166 = vpack.c.bf16 %v126, %v124
    %v167 = vpack.c.bf16 %v129, %v127
    %v168 = vpack.c.bf16 %v130, %v128
    %v169 = vpack.c.bf16 %v133, %v131
    %v170 = vpack.c.bf16 %v134, %v132
    %v171 = vpack.c.bf16 %v137, %v135
    %v172 = vpack.c.bf16 %v138, %v136
    %v173 = vpack.c.bf16 %v141, %v139
    %v174 = vpack.c.bf16 %v142, %v140
    %v207 = vunpack.c.l.b16 %v143
    %v208 = vunpack.c.l.b16 %v144
    %v209 = vunpack.c.h.b16 %v143
    %v210 = vunpack.c.h.b16 %v144
    %v211 = vunpack.c.l.b16 %v145
    %v212 = vunpack.c.l.b16 %v146
    %v213 = vunpack.c.h.b16 %v145
    %v214 = vunpack.c.h.b16 %v146
    %v215 = vunpack.c.l.b16 %v147
    %v216 = vunpack.c.l.b16 %v148
    %v217 = vunpack.c.h.b16 %v147
    %v218 = vunpack.c.h.b16 %v148
    %v219 = vunpack.c.l.b16 %v149
    %v220 = vunpack.c.l.b16 %v150
    %v221 = vunpack.c.h.b16 %v149
    %v222 = vunpack.c.h.b16 %v150
    %v223 = vunpack.c.l.b16 %v151
    %v224 = vunpack.c.l.b16 %v152
    %v225 = vunpack.c.h.b16 %v151
    %v226 = vunpack.c.h.b16 %v152
    %v227 = vunpack.c.l.b16 %v153
    %v228 = vunpack.c.l.b16 %v154
    %v229 = vunpack.c.h.b16 %v153
    %v230 = vunpack.c.h.b16 %v154
    %v231 = vunpack.c.l.b16 %v155
    %v232 = vunpack.c.l.b16 %v156
    %v233 = vunpack.c.h.b16 %v155
    %v234 = vunpack.c.h.b16 %v156
    %v235 = vunpack.c.l.b16 %v157
    %v236 = vunpack.c.l.b16 %v158
    %v237 = vunpack.c.h.b16 %v157
    %v238 = vunpack.c.h.b16 %v158
    %v239 = vunpack.c.l.b16 %v159
    %v240 = vunpack.c.l.b16 %v160
    %v241 = vunpack.c.h.b16 %v159
    %v242 = vunpack.c.h.b16 %v160
    %v243 = vunpack.c.l.b16 %v161
    %v244 = vunpack.c.l.b16 %v162
    %v245 = vunpack.c.h.b16 %v161
    %v246 = vunpack.c.h.b16 %v162
    %v247 = vunpack.c.l.b16 %v163
    %v248 = vunpack.c.l.b16 %v164
    %v249 = vunpack.c.h.b16 %v163
    %v250 = vunpack.c.h.b16 %v164
    %v251 = vunpack.c.l.b16 %v165
    %v252 = vunpack.c.l.b16 %v166
    %v253 = vunpack.c.h.b16 %v165
    %v254 = vunpack.c.h.b16 %v166
    %v255 = vunpack.c.l.b16 %v167
    %v256 = vunpack.c.l.b16 %v168
    %v257 = vunpack.c.h.b16 %v167
    %v258 = vunpack.c.h.b16 %v168
    %v259 = vunpack.c.l.b16 %v169
    %v260 = vunpack.c.l.b16 %v170
    %v261 = vunpack.c.h.b16 %v169
    %v262 = vunpack.c.h.b16 %v170
    %v263 = vunpack.c.l.b16 %v171
    %v264 = vunpack.c.l.b16 %v172
    %v265 = vunpack.c.h.b16 %v171
    %v266 = vunpack.c.h.b16 %v172
    %v267 = vunpack.c.l.b16 %v173
    %v268 = vunpack.c.l.b16 %v174
    %v269 = vunpack.c.h.b16 %v173
    %v270 = vunpack.c.h.b16 %v174
    %v271 = vpack.c.b16 %v208, %v207
    %v272 = vpack.c.b16 %v210, %v209
    %v273 = vpack.c.b16 %v212, %v211
    %v274 = vpack.c.b16 %v214, %v213
    %v275 = vpack.c.b16 %v216, %v215
    %v276 = vpack.c.b16 %v218, %v217
    %v277 = vpack.c.b16 %v220, %v219
    %v278 = vpack.c.b16 %v222, %v221
    %v279 = vpack.c.b16 %v224, %v223
    %v280 = vpack.c.b16 %v226, %v225
    %v281 = vpack.c.b16 %v228, %v227
    %v282 = vpack.c.b16 %v230, %v229
    %v283 = vpack.c.b16 %v232, %v231
    %v284 = vpack.c.b16 %v234, %v233
    %v285 = vpack.c.b16 %v236, %v235
    %v286 = vpack.c.b16 %v238, %v237
    %v287 = vpack.c.b16 %v240, %v239
    %v288 = vpack.c.b16 %v242, %v241
    %v289 = vpack.c.b16 %v244, %v243
    %v290 = vpack.c.b16 %v246, %v245
    %v291 = vpack.c.b16 %v248, %v247
    %v292 = vpack.c.b16 %v250, %v249
    %v293 = vpack.c.b16 %v252, %v251
    %v294 = vpack.c.b16 %v254, %v253
    %v295 = vpack.c.b16 %v256, %v255
    %v296 = vpack.c.b16 %v258, %v257
    %v297 = vpack.c.b16 %v260, %v259
    %v298 = vpack.c.b16 %v262, %v261
    %v299 = vpack.c.b16 %v264, %v263
    %v300 = vpack.c.b16 %v266, %v265
    %v301 = vpack.c.b16 %v268, %v267
    %v302 = vpack.c.b16 %v270, %v269
    %335 = vst [vmem:[%s2] sm:$0xff] %v271
    %336 = vst [vmem:[%s2 + $0x8] sm:$0xff] %v272
    %337 = vst [vmem:[%s2 + $0x10] sm:$0xff] %v273
    %338 = vst [vmem:[%s2 + $0x18] sm:$0xff] %v274
    %339 = vst [vmem:[%s2 + $0x20] sm:$0xff] %v275
    %340 = vst [vmem:[%s2 + $0x28] sm:$0xff] %v276
    %341 = vst [vmem:[%s2 + $0x30] sm:$0xff] %v277
    %342 = vst [vmem:[%s2 + $0x38] sm:$0xff] %v278
    %343 = vst [vmem:[%s2 + $0x40] sm:$0xff] %v279
    %344 = vst [vmem:[%s2 + $0x48] sm:$0xff] %v280
    %345 = vst [vmem:[%s2 + $0x50] sm:$0xff] %v281
    %346 = vst [vmem:[%s2 + $0x58] sm:$0xff] %v282
    %347 = vst [vmem:[%s2 + $0x60] sm:$0xff] %v283
    %348 = vst [vmem:[%s2 + $0x68] sm:$0xff] %v284
    %349 = vst [vmem:[%s2 + $0x70] sm:$0xff] %v285
    %350 = vst [vmem:[%s2 + $0x78] sm:$0xff] %v286
    %351 = vst [vmem:[%s2 + $0x80] sm:$0xff] %v287
    %352 = vst [vmem:[%s2 + $0x88] sm:$0xff] %v288
    %353 = vst [vmem:[%s2 + $0x90] sm:$0xff] %v289
    %354 = vst [vmem:[%s2 + $0x98] sm:$0xff] %v290
    %355 = vst [vmem:[%s2 + $0xa0] sm:$0xff] %v291
    %356 = vst [vmem:[%s2 + $0xa8] sm:$0xff] %v292
    %357 = vst [vmem:[%s2 + $0xb0] sm:$0xff] %v293
    %358 = vst [vmem:[%s2 + $0xb8] sm:$0xff] %v294
    %359 = vst [vmem:[%s2 + $0xc0] sm:$0xff] %v295
    %360 = vst [vmem:[%s2 + $0xc8] sm:$0xff] %v296
    %361 = vst [vmem:[%s2 + $0xd0] sm:$0xff] %v297
    %362 = vst [vmem:[%s2 + $0xd8] sm:$0xff] %v298
    %363 = vst [vmem:[%s2 + $0xe0] sm:$0xff] %v299
    %364 = vst [vmem:[%s2 + $0xe8] sm:$0xff] %v300
    %365 = vst [vmem:[%s2 + $0xf0] sm:$0xff] %v301
    %366 = vst [vmem:[%s2 + $0xf8] sm:$0xff] %v302
    %v367 = vld [vmem:[#allocation2] sm:$0xff]
    %v368 = vld [vmem:[#allocation2 + $0x8] sm:$0xff]
    %v369 = vld [vmem:[#allocation2 + $0x10] sm:$0xff]
    %v370 = vld [vmem:[#allocation2 + $0x18] sm:$0xff]
    %v371 = vld [vmem:[#allocation2 + $0x20] sm:$0xff]
    %v372 = vld [vmem:[#allocation2 + $0x28] sm:$0xff]
    %v373 = vld [vmem:[#allocation2 + $0x30] sm:$0xff]
    %v374 = vld [vmem:[#allocation2 + $0x38] sm:$0xff]
    %v375 = vld [vmem:[#allocation2 + $0x40] sm:$0xff]
    %v376 = vld [vmem:[#allocation2 + $0x48] sm:$0xff]
    %v377 = vld [vmem:[#allocation2 + $0x50] sm:$0xff]
    %v378 = vld [vmem:[#allocation2 + $0x58] sm:$0xff]
    %v379 = vld [vmem:[#allocation2 + $0x60] sm:$0xff]
    %v380 = vld [vmem:[#allocation2 + $0x68] sm:$0xff]
    %v381 = vld [vmem:[#allocation2 + $0x70] sm:$0xff]
    %v382 = vld [vmem:[#allocation2 + $0x78] sm:$0xff]
    %v383 = vld [vmem:[#allocation2 + $0x80] sm:$0xff]
    %v384 = vld [vmem:[#allocation2 + $0x88] sm:$0xff]
    %v385 = vld [vmem:[#allocation2 + $0x90] sm:$0xff]
    %v386 = vld [vmem:[#allocation2 + $0x98] sm:$0xff]
    %v387 = vld [vmem:[#allocation2 + $0xa0] sm:$0xff]
    %v388 = vld [vmem:[#allocation2 + $0xa8] sm:$0xff]
    %v389 = vld [vmem:[#allocation2 + $0xb0] sm:$0xff]
    %v390 = vld [vmem:[#allocation2 + $0xb8] sm:$0xff]
    %v391 = vld [vmem:[#allocation2 + $0xc0] sm:$0xff]
    %v392 = vld [vmem:[#allocation2 + $0xc8] sm:$0xff]
    %v393 = vld [vmem:[#allocation2 + $0xd0] sm:$0xff]
    %v394 = vld [vmem:[#allocation2 + $0xd8] sm:$0xff]
    %v395 = vld [vmem:[#allocation2 + $0xe0] sm:$0xff]
    %v396 = vld [vmem:[#allocation2 + $0xe8] sm:$0xff]
    %v397 = vld [vmem:[#allocation2 + $0xf0] sm:$0xff]
    %v398 = vld [vmem:[#allocation2 + $0xf8] sm:$0xff]
    %v399 = vadd.f32 %v79, %v80
    %400 = vadd.xlane.f32.xlu0 %v399
    %v401 = vpop.xlane.xlu0 %400
    %v402 = vadd.f32 %v81, %v82
    %403 = vadd.xlane.f32.xlu0 %v402
    %v404 = vpop.xlane.xlu0 %403
    %v405 = vadd.f32 %v83, %v84
    %406 = vadd.xlane.f32.xlu0 %v405
    %v407 = vpop.xlane.xlu0 %406
    %v408 = vadd.f32 %v85, %v86
    %409 = vadd.xlane.f32.xlu0 %v408
    %v410 = vpop.xlane.xlu0 %409
    %v411 = vadd.f32 %v87, %v88
    %412 = vadd.xlane.f32.xlu0 %v411
    %v413 = vpop.xlane.xlu0 %412
    %v414 = vadd.f32 %v89, %v90
    %415 = vadd.xlane.f32.xlu0 %v414
    %v416 = vpop.xlane.xlu0 %415
    %v417 = vadd.f32 %v91, %v92
    %418 = vadd.xlane.f32.xlu0 %v417
    %v419 = vpop.xlane.xlu0 %418
    %v420 = vadd.f32 %v93, %v94
    %421 = vadd.xlane.f32.xlu0 %v420
    %v422 = vpop.xlane.xlu0 %421
    %v423 = vadd.f32 %v95, %v96
    %424 = vadd.xlane.f32.xlu0 %v423
    %v425 = vpop.xlane.xlu0 %424
    %v426 = vadd.f32 %v97, %v98
    %427 = vadd.xlane.f32.xlu0 %v426
    %v428 = vpop.xlane.xlu0 %427
    %v429 = vadd.f32 %v99, %v100
    %430 = vadd.xlane.f32.xlu0 %v429
    %v431 = vpop.xlane.xlu0 %430
    %v432 = vadd.f32 %v101, %v102
    %433 = vadd.xlane.f32.xlu0 %v432
    %v434 = vpop.xlane.xlu0 %433
    %v435 = vadd.f32 %v103, %v104
    %436 = vadd.xlane.f32.xlu0 %v435
    %v437 = vpop.xlane.xlu0 %436
    %v438 = vadd.f32 %v105, %v106
    %439 = vadd.xlane.f32.xlu0 %v438
    %v440 = vpop.xlane.xlu0 %439
    %v441 = vadd.f32 %v107, %v108
    %442 = vadd.xlane.f32.xlu0 %v441
    %v443 = vpop.xlane.xlu0 %442
    %v444 = vadd.f32 %v109, %v110
    %445 = vadd.xlane.f32.xlu0 %v444
    %v446 = vpop.xlane.xlu0 %445
    %v447 = vadd.f32 %v111, %v112
    %448 = vadd.xlane.f32.xlu0 %v447
    %v449 = vpop.xlane.xlu0 %448
    %v450 = vadd.f32 %v113, %v114
    %451 = vadd.xlane.f32.xlu0 %v450
    %v452 = vpop.xlane.xlu0 %451
    %v453 = vadd.f32 %v115, %v116
    %454 = vadd.xlane.f32.xlu0 %v453
    %v455 = vpop.xlane.xlu0 %454
    %v456 = vadd.f32 %v117, %v118
    %457 = vadd.xlane.f32.xlu0 %v456
    %v458 = vpop.xlane.xlu0 %457
    %v459 = vadd.f32 %v119, %v120
    %460 = vadd.xlane.f32.xlu0 %v459
    %v461 = vpop.xlane.xlu0 %460
    %v462 = vadd.f32 %v121, %v122
    %463 = vadd.xlane.f32.xlu0 %v462
    %v464 = vpop.xlane.xlu0 %463
    %v465 = vadd.f32 %v123, %v124
    %466 = vadd.xlane.f32.xlu0 %v465
    %v467 = vpop.xlane.xlu0 %466
    %v468 = vadd.f32 %v125, %v126
    %469 = vadd.xlane.f32.xlu0 %v468
    %v470 = vpop.xlane.xlu0 %469
    %v471 = vadd.f32 %v127, %v128
    %472 = vadd.xlane.f32.xlu0 %v471
    %v473 = vpop.xlane.xlu0 %472
    %v474 = vadd.f32 %v129, %v130
    %475 = vadd.xlane.f32.xlu0 %v474
    %v476 = vpop.xlane.xlu0 %475
    %v477 = vadd.f32 %v131, %v132
    %478 = vadd.xlane.f32.xlu0 %v477
    %v479 = vpop.xlane.xlu0 %478
    %v480 = vadd.f32 %v133, %v134
    %481 = vadd.xlane.f32.xlu0 %v480
    %v482 = vpop.xlane.xlu0 %481
    %v483 = vadd.f32 %v135, %v136
    %484 = vadd.xlane.f32.xlu0 %v483
    %v485 = vpop.xlane.xlu0 %484
    %v486 = vadd.f32 %v137, %v138
    %487 = vadd.xlane.f32.xlu0 %v486
    %v488 = vpop.xlane.xlu0 %487
    %v489 = vadd.f32 %v139, %v140
    %490 = vadd.xlane.f32.xlu0 %v489
    %v491 = vpop.xlane.xlu0 %490
    %v492 = vadd.f32 %v141, %v142
    %493 = vadd.xlane.f32.xlu0 %v492
    %v494 = vpop.xlane.xlu0 %493
    %v495 = vadd.f32 %v367, %v401
    %v496 = vadd.f32 %v368, %v404
    %v497 = vadd.f32 %v369, %v407
    %v498 = vadd.f32 %v370, %v410
    %v499 = vadd.f32 %v371, %v413
    %v500 = vadd.f32 %v372, %v416
    %v501 = vadd.f32 %v373, %v419
    %v502 = vadd.f32 %v374, %v422
    %v503 = vadd.f32 %v375, %v425
    %v504 = vadd.f32 %v376, %v428
    %v505 = vadd.f32 %v377, %v431
    %v506 = vadd.f32 %v378, %v434
    %v507 = vadd.f32 %v379, %v437
    %v508 = vadd.f32 %v380, %v440
    %v509 = vadd.f32 %v381, %v443
    %v510 = vadd.f32 %v382, %v446
    %v511 = vadd.f32 %v383, %v449
    %v512 = vadd.f32 %v384, %v452
    %v513 = vadd.f32 %v385, %v455
    %v514 = vadd.f32 %v386, %v458
    %v515 = vadd.f32 %v387, %v461
    %v516 = vadd.f32 %v388, %v464
    %v517 = vadd.f32 %v389, %v467
    %v518 = vadd.f32 %v390, %v470
    %v519 = vadd.f32 %v391, %v473
    %v520 = vadd.f32 %v392, %v476
    %v521 = vadd.f32 %v393, %v479
    %v522 = vadd.f32 %v394, %v482
    %v523 = vadd.f32 %v395, %v485
    %v524 = vadd.f32 %v396, %v488
    %v525 = vadd.f32 %v397, %v491
    %v526 = vadd.f32 %v398, %v494
    %vm527 = vcmask 7168
    %528 = vst.msk [vmem:[#allocation2] sm:$0xff] %vm527, %v495
    %529 = vst.msk [vmem:[#allocation2 + $0x8] sm:$0xff] %vm527, %v496
    %530 = vst.msk [vmem:[#allocation2 + $0x10] sm:$0xff] %vm527, %v497
    %531 = vst.msk [vmem:[#allocation2 + $0x18] sm:$0xff] %vm527, %v498
    %532 = vst.msk [vmem:[#allocation2 + $0x20] sm:$0xff] %vm527, %v499
    %533 = vst.msk [vmem:[#allocation2 + $0x28] sm:$0xff] %vm527, %v500
    %534 = vst.msk [vmem:[#allocation2 + $0x30] sm:$0xff] %vm527, %v501
    %535 = vst.msk [vmem:[#allocation2 + $0x38] sm:$0xff] %vm527, %v502
    %536 = vst.msk [vmem:[#allocation2 + $0x40] sm:$0xff] %vm527, %v503
    %537 = vst.msk [vmem:[#allocation2 + $0x48] sm:$0xff] %vm527, %v504
    %538 = vst.msk [vmem:[#allocation2 + $0x50] sm:$0xff] %vm527, %v505
    %539 = vst.msk [vmem:[#allocation2 + $0x58] sm:$0xff] %vm527, %v506
    %540 = vst.msk [vmem:[#allocation2 + $0x60] sm:$0xff] %vm527, %v507
    %541 = vst.msk [vmem:[#allocation2 + $0x68] sm:$0xff] %vm527, %v508
    %542 = vst.msk [vmem:[#allocation2 + $0x70] sm:$0xff] %vm527, %v509
    %543 = vst.msk [vmem:[#allocation2 + $0x78] sm:$0xff] %vm527, %v510
    %544 = vst.msk [vmem:[#allocation2 + $0x80] sm:$0xff] %vm527, %v511
    %545 = vst.msk [vmem:[#allocation2 + $0x88] sm:$0xff] %vm527, %v512
    %546 = vst.msk [vmem:[#allocation2 + $0x90] sm:$0xff] %vm527, %v513
    %547 = vst.msk [vmem:[#allocation2 + $0x98] sm:$0xff] %vm527, %v514
    %548 = vst.msk [vmem:[#allocation2 + $0xa0] sm:$0xff] %vm527, %v515
    %549 = vst.msk [vmem:[#allocation2 + $0xa8] sm:$0xff] %vm527, %v516
    %550 = vst.msk [vmem:[#allocation2 + $0xb0] sm:$0xff] %vm527, %v517
    %551 = vst.msk [vmem:[#allocation2 + $0xb8] sm:$0xff] %vm527, %v518
    %552 = vst.msk [vmem:[#allocation2 + $0xc0] sm:$0xff] %vm527, %v519
    %553 = vst.msk [vmem:[#allocation2 + $0xc8] sm:$0xff] %vm527, %v520
    %554 = vst.msk [vmem:[#allocation2 + $0xd0] sm:$0xff] %vm527, %v521
    %555 = vst.msk [vmem:[#allocation2 + $0xd8] sm:$0xff] %vm527, %v522
    %556 = vst.msk [vmem:[#allocation2 + $0xe0] sm:$0xff] %vm527, %v523
    %557 = vst.msk [vmem:[#allocation2 + $0xe8] sm:$0xff] %vm527, %v524
    %558 = vst.msk [vmem:[#allocation2 + $0xf0] sm:$0xff] %vm527, %v525
    %559 = vst.msk [vmem:[#allocation2 + $0xf8] sm:$0xff] %vm527, %v526
    // Predicated region
    $region22: #{poly_conv_forward.2} parent=1 // pred_check
      %p560 = pneg %p42
    $region23: #{poly_conv_forward.2} parent=1 // pred_check_branch
      %562 = sbr.rel (%p560) target = $region25
    $region24: #{poly_conv_forward.2} parent=1 // pred_region
      %v563 = vld [vmem:[#allocation2] sm:$0xff]
      %v564 = vld [vmem:[#allocation2 + $0x8] sm:$0xff]
      %v565 = vld [vmem:[#allocation2 + $0x10] sm:$0xff]
      %v566 = vld [vmem:[#allocation2 + $0x18] sm:$0xff]
      %v567 = vld [vmem:[#allocation2 + $0x20] sm:$0xff]
      %v568 = vld [vmem:[#allocation2 + $0x28] sm:$0xff]
      %v569 = vld [vmem:[#allocation2 + $0x30] sm:$0xff]
      %v570 = vld [vmem:[#allocation2 + $0x38] sm:$0xff]
      %v571 = vld [vmem:[#allocation2 + $0x40] sm:$0xff]
      %v572 = vld [vmem:[#allocation2 + $0x48] sm:$0xff]
      %v573 = vld [vmem:[#allocation2 + $0x50] sm:$0xff]
      %v574 = vld [vmem:[#allocation2 + $0x58] sm:$0xff]
      %v575 = vld [vmem:[#allocation2 + $0x60] sm:$0xff]
      %v576 = vld [vmem:[#allocation2 + $0x68] sm:$0xff]
      %v577 = vld [vmem:[#allocation2 + $0x70] sm:$0xff]
      %v578 = vld [vmem:[#allocation2 + $0x78] sm:$0xff]
      %v579 = vld [vmem:[#allocation2 + $0x80] sm:$0xff]
      %v580 = vld [vmem:[#allocation2 + $0x88] sm:$0xff]
      %v581 = vld [vmem:[#allocation2 + $0x90] sm:$0xff]
      %v582 = vld [vmem:[#allocation2 + $0x98] sm:$0xff]
      %v583 = vld [vmem:[#allocation2 + $0xa0] sm:$0xff]
      %v584 = vld [vmem:[#allocation2 + $0xa8] sm:$0xff]
      %v585 = vld [vmem:[#allocation2 + $0xb0] sm:$0xff]
      %v586 = vld [vmem:[#allocation2 + $0xb8] sm:$0xff]
      %v587 = vld [vmem:[#allocation2 + $0xc0] sm:$0xff]
      %v588 = vld [vmem:[#allocation2 + $0xc8] sm:$0xff]
      %v589 = vld [vmem:[#allocation2 + $0xd0] sm:$0xff]
      %v590 = vld [vmem:[#allocation2 + $0xd8] sm:$0xff]
      %v591 = vld [vmem:[#allocation2 + $0xe0] sm:$0xff]
      %v592 = vld [vmem:[#allocation2 + $0xe8] sm:$0xff]
      %v593 = vld [vmem:[#allocation2 + $0xf0] sm:$0xff]
      %v594 = vld [vmem:[#allocation2 + $0xf8] sm:$0xff]
      %v595 = vmax.f32 %v563, 1.0
      %v596 = vmax.f32 %v564, 1.0
      %v597 = vmax.f32 %v565, 1.0
      %v598 = vmax.f32 %v566, 1.0
      %v599 = vmax.f32 %v567, 1.0
      %v600 = vmax.f32 %v568, 1.0
      %v601 = vmax.f32 %v569, 1.0
      %v602 = vmax.f32 %v570, 1.0
      %v603 = vmax.f32 %v571, 1.0
      %v604 = vmax.f32 %v572, 1.0
      %v605 = vmax.f32 %v573, 1.0
      %v606 = vmax.f32 %v574, 1.0
      %v607 = vmax.f32 %v575, 1.0
      %v608 = vmax.f32 %v576, 1.0
      %v609 = vmax.f32 %v577, 1.0
      %v610 = vmax.f32 %v578, 1.0
      %v611 = vmax.f32 %v579, 1.0
      %v612 = vmax.f32 %v580, 1.0
      %v613 = vmax.f32 %v581, 1.0
      %v614 = vmax.f32 %v582, 1.0
      %v615 = vmax.f32 %v583, 1.0
      %v616 = vmax.f32 %v584, 1.0
      %v617 = vmax.f32 %v585, 1.0
      %v618 = vmax.f32 %v586, 1.0
      %v619 = vmax.f32 %v587, 1.0
      %v620 = vmax.f32 %v588, 1.0
      %v621 = vmax.f32 %v589, 1.0
      %v622 = vmax.f32 %v590, 1.0
      %v623 = vmax.f32 %v591, 1.0
      %v624 = vmax.f32 %v592, 1.0
      %v625 = vmax.f32 %v593, 1.0
      %v626 = vmax.f32 %v594, 1.0
      %v627 = vrsqrt.pop %v595
      %v628 = vrsqrt.pop %v596
      %v629 = vrsqrt.pop %v597
      %v630 = vrsqrt.pop %v598
      %v631 = vrsqrt.pop %v599
      %v632 = vrsqrt.pop %v600
      %v633 = vrsqrt.pop %v601
      %v634 = vrsqrt.pop %v602
      %v635 = vrsqrt.pop %v603
      %v636 = vrsqrt.pop %v604
      %v637 = vrsqrt.pop %v605
      %v638 = vrsqrt.pop %v606
      %v639 = vrsqrt.pop %v607
      %v640 = vrsqrt.pop %v608
      %v641 = vrsqrt.pop %v609
      %v642 = vrsqrt.pop %v610
      %v643 = vrsqrt.pop %v611
      %v644 = vrsqrt.pop %v612
      %v645 = vrsqrt.pop %v613
      %v646 = vrsqrt.pop %v614
      %v647 = vrsqrt.pop %v615
      %v648 = vrsqrt.pop %v616
      %v649 = vrsqrt.pop %v617
      %v650 = vrsqrt.pop %v618
      %v651 = vrsqrt.pop %v619
      %v652 = vrsqrt.pop %v620
      %v653 = vrsqrt.pop %v621
      %v654 = vrsqrt.pop %v622
      %v655 = vrsqrt.pop %v623
      %v656 = vrsqrt.pop %v624
      %v657 = vrsqrt.pop %v625
      %v658 = vrsqrt.pop %v626
      %659 = vst.msk [vmem:[%s3] sm:$0xff] %vm527, %v627
      %660 = vst.msk [vmem:[%s3 + $0x8] sm:$0xff] %vm527, %v628
      %661 = vst.msk [vmem:[%s3 + $0x10] sm:$0xff] %vm527, %v629
      %662 = vst.msk [vmem:[%s3 + $0x18] sm:$0xff] %vm527, %v630
      %663 = vst.msk [vmem:[%s3 + $0x20] sm:$0xff] %vm527, %v631
      %664 = vst.msk [vmem:[%s3 + $0x28] sm:$0xff] %vm527, %v632
      %665 = vst.msk [vmem:[%s3 + $0x30] sm:$0xff] %vm527, %v633
      %666 = vst.msk [vmem:[%s3 + $0x38] sm:$0xff] %vm527, %v634
      %667 = vst.msk [vmem:[%s3 + $0x40] sm:$0xff] %vm527, %v635
      %668 = vst.msk [vmem:[%s3 + $0x48] sm:$0xff] %vm527, %v636
      %669 = vst.msk [vmem:[%s3 + $0x50] sm:$0xff] %vm527, %v637
      %670 = vst.msk [vmem:[%s3 + $0x58] sm:$0xff] %vm527, %v638
      %671 = vst.msk [vmem:[%s3 + $0x60] sm:$0xff] %vm527, %v639
      %672 = vst.msk [vmem:[%s3 + $0x68] sm:$0xff] %vm527, %v640
      %673 = vst.msk [vmem:[%s3 + $0x70] sm:$0xff] %vm527, %v641
      %674 = vst.msk [vmem:[%s3 + $0x78] sm:$0xff] %vm527, %v642
      %675 = vst.msk [vmem:[%s3 + $0x80] sm:$0xff] %vm527, %v643
      %676 = vst.msk [vmem:[%s3 + $0x88] sm:$0xff] %vm527, %v644
      %677 = vst.msk [vmem:[%s3 + $0x90] sm:$0xff] %vm527, %v645
      %678 = vst.msk [vmem:[%s3 + $0x98] sm:$0xff] %vm527, %v646
      %679 = vst.msk [vmem:[%s3 + $0xa0] sm:$0xff] %vm527, %v647
      %680 = vst.msk [vmem:[%s3 + $0xa8] sm:$0xff] %vm527, %v648
      %681 = vst.msk [vmem:[%s3 + $0xb0] sm:$0xff] %vm527, %v649
      %682 = vst.msk [vmem:[%s3 + $0xb8] sm:$0xff] %vm527, %v650
      %683 = vst.msk [vmem:[%s3 + $0xc0] sm:$0xff] %vm527, %v651
      %684 = vst.msk [vmem:[%s3 + $0xc8] sm:$0xff] %vm527, %v652
      %685 = vst.msk [vmem:[%s3 + $0xd0] sm:$0xff] %vm527, %v653
      %686 = vst.msk [vmem:[%s3 + $0xd8] sm:$0xff] %vm527, %v654
      %687 = vst.msk [vmem:[%s3 + $0xe0] sm:$0xff] %vm527, %v655
      %688 = vst.msk [vmem:[%s3 + $0xe8] sm:$0xff] %vm527, %v656
      %689 = vst.msk [vmem:[%s3 + $0xf0] sm:$0xff] %vm527, %v657
      %690 = vst.msk [vmem:[%s3 + $0xf8] sm:$0xff] %vm527, %v658
      %v691 = vld [vmem:[#allocation5] sm:$0xff]
      %v692 = vld [vmem:[#allocation5 + $0x8] sm:$0xff]
      %v693 = vld [vmem:[#allocation5 + $0x10] sm:$0xff]
      %v694 = vld [vmem:[#allocation5 + $0x18] sm:$0xff]
      %v695 = vld [vmem:[#allocation5 + $0x20] sm:$0xff]
      %v696 = vld [vmem:[#allocation5 + $0x28] sm:$0xff]
      %v697 = vld [vmem:[#allocation5 + $0x30] sm:$0xff]
      %v698 = vld [vmem:[#allocation5 + $0x38] sm:$0xff]
      %v699 = vld [vmem:[#allocation5 + $0x40] sm:$0xff]
      %v700 = vld [vmem:[#allocation5 + $0x48] sm:$0xff]
      %v701 = vld [vmem:[#allocation5 + $0x50] sm:$0xff]
      %v702 = vld [vmem:[#allocation5 + $0x58] sm:$0xff]
      %v703 = vld [vmem:[#allocation5 + $0x60] sm:$0xff]
      %v704 = vld [vmem:[#allocation5 + $0x68] sm:$0xff]
      %v705 = vld [vmem:[#allocation5 + $0x70] sm:$0xff]
      %v706 = vld [vmem:[#allocation5 + $0x78] sm:$0xff]
      %v707 = vld [vmem:[#allocation5 + $0x80] sm:$0xff]
      %v708 = vld [vmem:[#allocation5 + $0x88] sm:$0xff]
      %v709 = vld [vmem:[#allocation5 + $0x90] sm:$0xff]
      %v710 = vld [vmem:[#allocation5 + $0x98] sm:$0xff]
      %v711 = vld [vmem:[#allocation5 + $0xa0] sm:$0xff]
      %v712 = vld [vmem:[#allocation5 + $0xa8] sm:$0xff]
      %v713 = vld [vmem:[#allocation5 + $0xb0] sm:$0xff]
      %v714 = vld [vmem:[#allocation5 + $0xb8] sm:$0xff]
      %v715 = vld [vmem:[#allocation5 + $0xc0] sm:$0xff]
      %v716 = vld [vmem:[#allocation5 + $0xc8] sm:$0xff]
      %v717 = vld [vmem:[#allocation5 + $0xd0] sm:$0xff]
      %v718 = vld [vmem:[#allocation5 + $0xd8] sm:$0xff]
      %v719 = vld [vmem:[#allocation5 + $0xe0] sm:$0xff]
      %v720 = vld [vmem:[#allocation5 + $0xe8] sm:$0xff]
      %v721 = vld [vmem:[#allocation5 + $0xf0] sm:$0xff]
      %v722 = vld [vmem:[#allocation5 + $0xf8] sm:$0xff]
      %724 = vset.pattern.permute.xlu0 0
      %725 = vperm.xlu0 %724, %v627
      %v726 = vpop.permute.xlu0 %725
      %729 = vset.pattern.permute.xlu0 0
      %730 = vperm.xlu0 %729, %v628
      %v731 = vpop.permute.xlu0 %730
      %734 = vset.pattern.permute.xlu0 0
      %735 = vperm.xlu0 %734, %v629
      %v736 = vpop.permute.xlu0 %735
      %739 = vset.pattern.permute.xlu0 0
      %740 = vperm.xlu0 %739, %v630
      %v741 = vpop.permute.xlu0 %740
      %744 = vset.pattern.permute.xlu0 0
      %745 = vperm.xlu0 %744, %v631
      %v746 = vpop.permute.xlu0 %745
      %749 = vset.pattern.permute.xlu0 0
      %750 = vperm.xlu0 %749, %v632
      %v751 = vpop.permute.xlu0 %750
      %754 = vset.pattern.permute.xlu0 0
      %755 = vperm.xlu0 %754, %v633
      %v756 = vpop.permute.xlu0 %755
      %759 = vset.pattern.permute.xlu0 0
      %760 = vperm.xlu0 %759, %v634
      %v761 = vpop.permute.xlu0 %760
      %764 = vset.pattern.permute.xlu0 0
      %765 = vperm.xlu0 %764, %v635
      %v766 = vpop.permute.xlu0 %765
      %769 = vset.pattern.permute.xlu0 0
      %770 = vperm.xlu0 %769, %v636
      %v771 = vpop.permute.xlu0 %770
      %774 = vset.pattern.permute.xlu0 0
      %775 = vperm.xlu0 %774, %v637
      %v776 = vpop.permute.xlu0 %775
      %779 = vset.pattern.permute.xlu0 0
      %780 = vperm.xlu0 %779, %v638
      %v781 = vpop.permute.xlu0 %780
      %784 = vset.pattern.permute.xlu0 0
      %785 = vperm.xlu0 %784, %v639
      %v786 = vpop.permute.xlu0 %785
      %789 = vset.pattern.permute.xlu0 0
      %790 = vperm.xlu0 %789, %v640
      %v791 = vpop.permute.xlu0 %790
      %794 = vset.pattern.permute.xlu0 0
      %795 = vperm.xlu0 %794, %v641
      %v796 = vpop.permute.xlu0 %795
      %799 = vset.pattern.permute.xlu0 0
      %800 = vperm.xlu0 %799, %v642
      %v801 = vpop.permute.xlu0 %800
      %804 = vset.pattern.permute.xlu0 0
      %805 = vperm.xlu0 %804, %v643
      %v806 = vpop.permute.xlu0 %805
      %809 = vset.pattern.permute.xlu0 0
      %810 = vperm.xlu0 %809, %v644
      %v811 = vpop.permute.xlu0 %810
      %814 = vset.pattern.permute.xlu0 0
      %815 = vperm.xlu0 %814, %v645
      %v816 = vpop.permute.xlu0 %815
      %819 = vset.pattern.permute.xlu0 0
      %820 = vperm.xlu0 %819, %v646
      %v821 = vpop.permute.xlu0 %820
      %824 = vset.pattern.permute.xlu0 0
      %825 = vperm.xlu0 %824, %v647
      %v826 = vpop.permute.xlu0 %825
      %829 = vset.pattern.permute.xlu0 0
      %830 = vperm.xlu0 %829, %v648
      %v831 = vpop.permute.xlu0 %830
      %834 = vset.pattern.permute.xlu0 0
      %835 = vperm.xlu0 %834, %v649
      %v836 = vpop.permute.xlu0 %835
      %839 = vset.pattern.permute.xlu0 0
      %840 = vperm.xlu0 %839, %v650
      %v841 = vpop.permute.xlu0 %840
      %844 = vset.pattern.permute.xlu0 0
      %845 = vperm.xlu0 %844, %v651
      %v846 = vpop.permute.xlu0 %845
      %849 = vset.pattern.permute.xlu0 0
      %850 = vperm.xlu0 %849, %v652
      %v851 = vpop.permute.xlu0 %850
      %854 = vset.pattern.permute.xlu0 0
      %855 = vperm.xlu0 %854, %v653
      %v856 = vpop.permute.xlu0 %855
      %859 = vset.pattern.permute.xlu0 0
      %860 = vperm.xlu0 %859, %v654
      %v861 = vpop.permute.xlu0 %860
      %864 = vset.pattern.permute.xlu0 0
      %865 = vperm.xlu0 %864, %v655
      %v866 = vpop.permute.xlu0 %865
      %869 = vset.pattern.permute.xlu0 0
      %870 = vperm.xlu0 %869, %v656
      %v871 = vpop.permute.xlu0 %870
      %874 = vset.pattern.permute.xlu0 0
      %875 = vperm.xlu0 %874, %v657
      %v876 = vpop.permute.xlu0 %875
      %879 = vset.pattern.permute.xlu0 0
      %880 = vperm.xlu0 %879, %v658
      %v881 = vpop.permute.xlu0 %880
      %v883 = vmul.f32 %v726, %v691
      %v884 = vmul.f32 %v731, %v692
      %v885 = vmul.f32 %v736, %v693
      %v886 = vmul.f32 %v741, %v694
      %v887 = vmul.f32 %v746, %v695
      %v888 = vmul.f32 %v751, %v696
      %v889 = vmul.f32 %v756, %v697
      %v890 = vmul.f32 %v761, %v698
      %v891 = vmul.f32 %v766, %v699
      %v892 = vmul.f32 %v771, %v700
      %v893 = vmul.f32 %v776, %v701
      %v894 = vmul.f32 %v781, %v702
      %v895 = vmul.f32 %v786, %v703
      %v896 = vmul.f32 %v791, %v704
      %v897 = vmul.f32 %v796, %v705
      %v898 = vmul.f32 %v801, %v706
      %v899 = vmul.f32 %v806, %v707
      %v900 = vmul.f32 %v811, %v708
      %v901 = vmul.f32 %v816, %v709
      %v902 = vmul.f32 %v821, %v710
      %v903 = vmul.f32 %v826, %v711
      %v904 = vmul.f32 %v831, %v712
      %v905 = vmul.f32 %v836, %v713
      %v906 = vmul.f32 %v841, %v714
      %v907 = vmul.f32 %v846, %v715
      %v908 = vmul.f32 %v851, %v716
      %v909 = vmul.f32 %v856, %v717
      %v910 = vmul.f32 %v861, %v718
      %v911 = vmul.f32 %v866, %v719
      %v912 = vmul.f32 %v871, %v720
      %v913 = vmul.f32 %v876, %v721
      %v914 = vmul.f32 %v881, %v722
      %v915 = vpack.c.bf16 %v884, %v883
      %v916 = vpack.c.bf16 %v886, %v885
      %v917 = vpack.c.bf16 %v888, %v887
      %v918 = vpack.c.bf16 %v890, %v889
      %v919 = vpack.c.bf16 %v892, %v891
      %v920 = vpack.c.bf16 %v894, %v893
      %v921 = vpack.c.bf16 %v896, %v895
      %v922 = vpack.c.bf16 %v898, %v897
      %v923 = vpack.c.bf16 %v900, %v899
      %v924 = vpack.c.bf16 %v902, %v901
      %v925 = vpack.c.bf16 %v904, %v903
      %v926 = vpack.c.bf16 %v906, %v905
      %v927 = vpack.c.bf16 %v908, %v907
      %v928 = vpack.c.bf16 %v910, %v909
      %v929 = vpack.c.bf16 %v912, %v911
      %v930 = vpack.c.bf16 %v914, %v913
      %v947 = vunpack.c.l.b16 %v915
      %v948 = vunpack.c.h.b16 %v915
      %v949 = vunpack.c.l.b16 %v916
      %v950 = vunpack.c.h.b16 %v916
      %v951 = vunpack.c.l.b16 %v917
      %v952 = vunpack.c.h.b16 %v917
      %v953 = vunpack.c.l.b16 %v918
      %v954 = vunpack.c.h.b16 %v918
      %v955 = vunpack.c.l.b16 %v919
      %v956 = vunpack.c.h.b16 %v919
      %v957 = vunpack.c.l.b16 %v920
      %v958 = vunpack.c.h.b16 %v920
      %v959 = vunpack.c.l.b16 %v921
      %v960 = vunpack.c.h.b16 %v921
      %v961 = vunpack.c.l.b16 %v922
      %v962 = vunpack.c.h.b16 %v922
      %v963 = vunpack.c.l.b16 %v923
      %v964 = vunpack.c.h.b16 %v923
      %v965 = vunpack.c.l.b16 %v924
      %v966 = vunpack.c.h.b16 %v924
      %v967 = vunpack.c.l.b16 %v925
      %v968 = vunpack.c.h.b16 %v925
      %v969 = vunpack.c.l.b16 %v926
      %v970 = vunpack.c.h.b16 %v926
      %v971 = vunpack.c.l.b16 %v927
      %v972 = vunpack.c.h.b16 %v927
      %v973 = vunpack.c.l.b16 %v928
      %v974 = vunpack.c.h.b16 %v928
      %v975 = vunpack.c.l.b16 %v929
      %v976 = vunpack.c.h.b16 %v929
      %v977 = vunpack.c.l.b16 %v930
      %v978 = vunpack.c.h.b16 %v930
      %v979 = vpack.c.b16 %v947, %v947
      %v980 = vpack.c.b16 %v948, %v948
      %v981 = vpack.c.b16 %v949, %v949
      %v982 = vpack.c.b16 %v950, %v950
      %v983 = vpack.c.b16 %v951, %v951
      %v984 = vpack.c.b16 %v952, %v952
      %v985 = vpack.c.b16 %v953, %v953
      %v986 = vpack.c.b16 %v954, %v954
      %v987 = vpack.c.b16 %v955, %v955
      %v988 = vpack.c.b16 %v956, %v956
      %v989 = vpack.c.b16 %v957, %v957
      %v990 = vpack.c.b16 %v958, %v958
      %v991 = vpack.c.b16 %v959, %v959
      %v992 = vpack.c.b16 %v960, %v960
      %v993 = vpack.c.b16 %v961, %v961
      %v994 = vpack.c.b16 %v962, %v962
      %v995 = vpack.c.b16 %v963, %v963
      %v996 = vpack.c.b16 %v964, %v964
      %v997 = vpack.c.b16 %v965, %v965
      %v998 = vpack.c.b16 %v966, %v966
      %v999 = vpack.c.b16 %v967, %v967
      %v1000 = vpack.c.b16 %v968, %v968
      %v1001 = vpack.c.b16 %v969, %v969
      %v1002 = vpack.c.b16 %v970, %v970
      %v1003 = vpack.c.b16 %v971, %v971
      %v1004 = vpack.c.b16 %v972, %v972
      %v1005 = vpack.c.b16 %v973, %v973
      %v1006 = vpack.c.b16 %v974, %v974
      %v1007 = vpack.c.b16 %v975, %v975
      %v1008 = vpack.c.b16 %v976, %v976
      %v1009 = vpack.c.b16 %v977, %v977
      %v1010 = vpack.c.b16 %v978, %v978
      %1043 = vst [vmem:[%s4] sm:$0xf] %v979
      %1044 = vst [vmem:[%s4 + $0x4] sm:$0xf] %v980
      %1045 = vst [vmem:[%s4 + $0x8] sm:$0xf] %v981
      %1046 = vst [vmem:[%s4 + $0xc] sm:$0xf] %v982
      %1047 = vst [vmem:[%s4 + $0x10] sm:$0xf] %v983
      %1048 = vst [vmem:[%s4 + $0x14] sm:$0xf] %v984
      %1049 = vst [vmem:[%s4 + $0x18] sm:$0xf] %v985
      %1050 = vst [vmem:[%s4 + $0x1c] sm:$0xf] %v986
      %1051 = vst [vmem:[%s4 + $0x20] sm:$0xf] %v987
      %1052 = vst [vmem:[%s4 + $0x24] sm:$0xf] %v988
      %1053 = vst [vmem:[%s4 + $0x28] sm:$0xf] %v989
      %1054 = vst [vmem:[%s4 + $0x2c] sm:$0xf] %v990
      %1055 = vst [vmem:[%s4 + $0x30] sm:$0xf] %v991
      %1056 = vst [vmem:[%s4 + $0x34] sm:$0xf] %v992
      %1057 = vst [vmem:[%s4 + $0x38] sm:$0xf] %v993
      %1058 = vst [vmem:[%s4 + $0x3c] sm:$0xf] %v994
      %1059 = vst [vmem:[%s4 + $0x40] sm:$0xf] %v995
      %1060 = vst [vmem:[%s4 + $0x44] sm:$0xf] %v996
      %1061 = vst [vmem:[%s4 + $0x48] sm:$0xf] %v997
      %1062 = vst [vmem:[%s4 + $0x4c] sm:$0xf] %v998
      %1063 = vst [vmem:[%s4 + $0x50] sm:$0xf] %v999
      %1064 = vst [vmem:[%s4 + $0x54] sm:$0xf] %v1000
      %1065 = vst [vmem:[%s4 + $0x58] sm:$0xf] %v1001
      %1066 = vst [vmem:[%s4 + $0x5c] sm:$0xf] %v1002
      %1067 = vst [vmem:[%s4 + $0x60] sm:$0xf] %v1003
      %1068 = vst [vmem:[%s4 + $0x64] sm:$0xf] %v1004
      %1069 = vst [vmem:[%s4 + $0x68] sm:$0xf] %v1005
      %1070 = vst [vmem:[%s4 + $0x6c] sm:$0xf] %v1006
      %1071 = vst [vmem:[%s4 + $0x70] sm:$0xf] %v1007
      %1072 = vst [vmem:[%s4 + $0x74] sm:$0xf] %v1008
      %1073 = vst [vmem:[%s4 + $0x78] sm:$0xf] %v1009
      %1074 = vst [vmem:[%s4 + $0x7c] sm:$0xf] %v1010
    $region25: #{poly_conv_forward.2} parent=1 // pred_fallthru
      _
    // Predicated region
    $region26: #{poly_conv_forward.2} parent=1 // pred_check
      _
    $region27: #{poly_conv_forward.2} parent=1 // pred_check_branch
      %1076 = sbr.rel (0) target = $region29
    $region28: #{poly_conv_forward.2} parent=1 // pred_region
      _
    $region29: #{poly_conv_forward.2} parent=1 // pred_fallthru
      _
    // Predicated region
    $region30: #{poly_conv_forward.2} parent=1 // pred_check
      _
    $region31: #{poly_conv_forward.2} parent=1 // pred_check_branch
      %1078 = sbr.rel (0) target = $region33
    $region32: #{poly_conv_forward.2} parent=1 // pred_region
      _
    $region33: #{poly_conv_forward.2} parent=1 // pred_fallthru
      _
    // Predicated region
    $region34: #{poly_conv_forward.2} parent=1 // pred_check
      _
    $region35: #{poly_conv_forward.2} parent=1 // pred_check_branch
      %1080 = sbr.rel (0) target = $region37
    $region36: #{poly_conv_forward.2} parent=1 // pred_region
      _
    $region37: #{poly_conv_forward.2} parent=1 // pred_fallthru
      _
    // Predicated region
    $region38: #{poly_conv_forward.2} parent=1 // pred_check
      _
    $region39: #{poly_conv_forward.2} parent=1 // pred_check_branch
      %1082 = sbr.rel (0) target = $region41
    $region40: #{poly_conv_forward.2} parent=1 // pred_region
      _
    $region41: #{poly_conv_forward.2} parent=1 // pred_fallthru
      _
    // Predicated region
    $region42: #{poly_conv_forward.2} parent=1 // pred_check
      _
    $region43: #{poly_conv_forward.2} parent=1 // pred_check_branch
      %1084 = sbr.rel (0) target = $region45
    $region44: #{poly_conv_forward.2} parent=1 // pred_region
      _
    $region45: #{poly_conv_forward.2} parent=1 // pred_fallthru
      _
    // Predicated region
    $region46: #{poly_conv_forward.2} parent=1 // pred_check
      _
    $region47: #{poly_conv_forward.2} parent=1 // pred_check_branch
      %1086 = sbr.rel (0) target = $region49
    $region48: #{poly_conv_forward.2} parent=1 // pred_region
      _
    $region49: #{poly_conv_forward.2} parent=1 // pred_fallthru
      _
    %1087 = vsyncpa [#allocation4], 1
    %1088 = vsyncpa [#allocation6], 1

</llo_original>
